<compile_context>
chip_gen: v7x
topology: tpu7x:2x2x1
jax: 0.10.0
libtpu: 0.0.40
codegen_flags: <defaults>
</compile_context>

<pallas_src>
import math

import jax
import jax.numpy as jnp
from jax.experimental import pallas as pl
from jax.experimental.pallas import tpu as pltpu


def pointer_kernel(w_ref, m1_ref, m2_ref, m3_ref, mask_ref, out_ref):
    # w_ref:    (3, 2, D)   fused weights [Wa, Wb, Wc]
    # m*_ref:   (Bt, D, L)  batch block, channels-major (torch NCL)
    # mask_ref: (Bt, 1, L)  int8 (nonzero == valid position)
    # out_ref:  (Bt, 2, L)  float32 log-probabilities, row 0 = p1, row 1 = p2
    wa = w_ref[0]                       # (2, D): M1 contributes to (y1, y2)
    wb = w_ref[1]                       # (2, D): M2 contributes to y1 only
    wc = w_ref[2]                       # (2, D): M3 contributes to y2 only

    bt = m1_ref.shape[0]                # static batch-block size (small, unrolled)
    for b in range(bt):
        m1 = m1_ref[b]                  # (D, L), native dtype feeds the MXU
        m2 = m2_ref[b]
        m3 = m3_ref[b]
        mask = mask_ref[b] != 0         # (1, L) bool, broadcasts over both heads

        # Fused kernel-size-1 convolutions with f32 accumulation.
        y = (jnp.dot(wa, m1, preferred_element_type=jnp.float32)
             + jnp.dot(wb, m2, preferred_element_type=jnp.float32)
             + jnp.dot(wc, m3, preferred_element_type=jnp.float32))   # (2, L) f32

        # mask_logits: keep logits where mask, else -1e30 (single vsel per elem).
        y = jnp.where(mask, y, -1e30)

        # log_softmax over the sequence (lane) axis, shared for both heads.
        m = jnp.max(y, axis=-1, keepdims=True)
        s = y - m
        lse = jnp.log(jnp.sum(jnp.exp(s), axis=-1, keepdims=True))
        out_ref[b] = s - lse            # (2, L) lane-dense store


def _pick_batch_block(B, target):
    """Largest divisor of B that is <= target (avoids ragged last block)."""
    bt = max(1, min(B, target))
    while B % bt:
        bt -= 1
    return bt


def pointer_forward(m1_ncl, m2_ncl, m3_ncl, mask, w1, w2, *, batch_block=8):
    """Pointer head forward.

    m*_ncl: (B, D, L) in torch NCL layout (f32 or bf16 — bf16 halves HBM reads).
    mask:   (B, L), nonzero == valid.
    w1, w2: (2*D, 1) conv weights (out_channels=1, in_channels=2*D, k=1).
    Returns (p1, p2), each (B, L) float32 log-probabilities.
    """
    B, D, L = m1_ncl.shape
    in_dtype = m1_ncl.dtype
    in_itemsize = jnp.dtype(in_dtype).itemsize

    Bt = _pick_batch_block(B, batch_block)
    grid = (B // Bt,)

    # Fuse both heads' weights into a concat-free, lane-dense (3, 2, D) stack,
    # cast to the input dtype so the MXU consumes narrow operands directly.
    # (For bf16 inputs this rounds the f32 weights to bf16; accumulation is f32.)
    w1f = w1.reshape(2 * D)
    w2f = w2.reshape(2 * D)
    zero = jnp.zeros((D,), dtype=w1f.dtype)
    W = jnp.stack([
        jnp.stack([w1f[:D], w2f[:D]]),      # Wa: M1 -> (y1, y2)
        jnp.stack([w1f[D:], zero]),         # Wb: M2 -> y1
        jnp.stack([zero, w2f[D:]]),         # Wc: M3 -> y2
    ]).astype(in_dtype)                     # (3, 2, D)

    mask_i8 = (mask != 0).astype(jnp.int8).reshape(B, 1, L)

    cost = pl.CostEstimate(
        flops=int(3 * 2 * 2 * D * L * B),                       # 3 (2,D)@(D,L) dots / batch
        transcendentals=int(B * 2 * (L + 1)),                   # exp + log per head
        bytes_accessed=int(B * (3 * D * L * in_itemsize + L + 2 * L * 4)
                           + 3 * 2 * D * in_itemsize),
    )

    out = pl.pallas_call(
        pointer_kernel,
        out_shape=jax.ShapeDtypeStruct((B, 2, L), jnp.float32),
        grid=grid,
        in_specs=[
            pl.BlockSpec((3, 2, D), lambda i: (0, 0, 0)),    # fused weights (resident)
            pl.BlockSpec((Bt, D, L), lambda i: (i, 0, 0)),   # M1 (NCL, no transpose)
            pl.BlockSpec((Bt, D, L), lambda i: (i, 0, 0)),   # M2
            pl.BlockSpec((Bt, D, L), lambda i: (i, 0, 0)),   # M3
            pl.BlockSpec((Bt, 1, L), lambda i: (i, 0, 0)),   # mask (int8)
        ],
        out_specs=pl.BlockSpec((Bt, 2, L), lambda i: (i, 0, 0)),  # merged p1/p2
        compiler_params=pltpu.CompilerParams(
            dimension_semantics=("parallel",),   # megacore: shard batch blocks
        ),
        cost_estimate=cost,
    )(W, m1_ncl, m2_ncl, m3_ncl, mask_i8)

    return out[:, 0, :], out[:, 1, :]


def _xavier_uniform(key, shape, fan_in, fan_out):
    bound = math.sqrt(6.0 / (fan_in + fan_out))
    return jax.random.uniform(key, shape, dtype=jnp.float32,
                              minval=-bound, maxval=bound)


if __name__ == "__main__":
    # Small shapes consistent with the module; L kept lane-dense (multiple of 128).
    B, D, L = 8, 32, 128

    key = jax.random.PRNGKey(0)
    k1, k2, k3, kw1, kw2 = jax.random.split(key, 5)

    M1 = jax.random.normal(k1, (B, D, L), dtype=jnp.float32)  # torch NCL layout
    M2 = jax.random.normal(k2, (B, D, L), dtype=jnp.float32)
    M3 = jax.random.normal(k3, (B, D, L), dtype=jnp.float32)

    # Binary mask: first `valid[b]` positions are 1, rest 0 (typical QANet mask).
    valid = jnp.array([L, L - 5, L - 17, L // 2, L, 3, L - 1, L - 63], dtype=jnp.int32)
    mask = (jnp.arange(L)[None, :] < valid[:, None]).astype(jnp.float32)  # (B, L)

    # Conv1d weights (out=1, in=2D, k=1), xavier_uniform (fan_in=2D, fan_out=1),
    # flattened to (2D, 1) like the torch module.
    w1 = _xavier_uniform(kw1, (2 * D, 1), fan_in=2 * D, fan_out=1)
    w2 = _xavier_uniform(kw2, (2 * D, 1), fan_in=2 * D, fan_out=1)

    # batch_block=4 -> grid of 2 steps (exercises the pipeline / megacore split).
    p1, p2 = pointer_forward(M1, M2, M3, mask, w1, w2, batch_block=4)
    jax.block_until_ready((p1, p2))

    # Sanity check against a pure-JAX reference of the same math.
    def ref(m1, m2, m3, mask, w1, w2):
        x1 = jnp.concatenate([m1, m2], axis=1)  # (B, 2D, L)
        x2 = jnp.concatenate([m1, m3], axis=1)
        y1 = jnp.einsum('bcl,c->bl', x1, w1[:, 0])
        y2 = jnp.einsum('bcl,c->bl', x2, w2[:, 0])
        y1 = y1 * mask + (1 - mask) * (-1e30)
        y2 = y2 * mask + (1 - mask) * (-1e30)
        return jax.nn.log_softmax(y1, axis=1), jax.nn.log_softmax(y2, axis=1)

    r1, r2 = ref(M1, M2, M3, mask, w1, w2)
    assert jnp.allclose(p1, r1, atol=1e-3, rtol=1e-3), float(jnp.max(jnp.abs(p1 - r1)))
    assert jnp.allclose(p2, r2, atol=1e-3, rtol=1e-3), float(jnp.max(jnp.abs(p2 - r2)))

    print("KERNEL_OK")
</pallas_src>

<mosaic_0001>
module attributes {stable_mosaic.version = 11 : i64} {
  func.func @pointer_kernel(%arg0: i32, %arg1: memref<3x2x32xf32, #tpu.memory_space<vmem>>, %arg2: memref<4x32x128xf32, #tpu.memory_space<vmem>>, %arg3: memref<4x32x128xf32, #tpu.memory_space<vmem>>, %arg4: memref<4x32x128xf32, #tpu.memory_space<vmem>>, %arg5: memref<4x1x128xi8, #tpu.memory_space<vmem>>, %arg6: memref<4x2x128xf32, #tpu.memory_space<vmem>>) attributes {dimension_semantics = [#tpu.dimension_semantics<parallel>], iteration_bounds = array<i64: 2>, scalar_prefetch = 0 : i64, scratch_operands = 0 : i64, tpu.core_type = #tpu.core_type<tc>, window_params = [{pipeline_mode = #tpu.pipeline_mode<synchronous>, transform_indices = @transform_0, window_bounds = array<i64: 3, 2, 32>}, {transform_indices = @transform_1, window_bounds = array<i64: 4, 32, 128>}, {transform_indices = @transform_2, window_bounds = array<i64: 4, 32, 128>}, {transform_indices = @transform_3, window_bounds = array<i64: 4, 32, 128>}, {transform_indices = @transform_4, window_bounds = array<i64: 4, 1, 128>}, {transform_indices = @transform_5, window_bounds = array<i64: 4, 2, 128>}]} {
    %c0 = arith.constant 0 : index
    %c0_0 = arith.constant 0 : index
    %c0_1 = arith.constant 0 : index
    %0 = vector.load %arg1[%c0, %c0_0, %c0_1] : memref<3x2x32xf32, #tpu.memory_space<vmem>>, vector<1x2x32xf32>
    %1 = vector.shape_cast %0 : vector<1x2x32xf32> to vector<2x32xf32>
    %c1 = arith.constant 1 : index
    %c0_2 = arith.constant 0 : index
    %c0_3 = arith.constant 0 : index
    %2 = vector.load %arg1[%c1, %c0_2, %c0_3] : memref<3x2x32xf32, #tpu.memory_space<vmem>>, vector<1x2x32xf32>
    %3 = vector.shape_cast %2 : vector<1x2x32xf32> to vector<2x32xf32>
    %c2 = arith.constant 2 : index
    %c0_4 = arith.constant 0 : index
    %c0_5 = arith.constant 0 : index
    %4 = vector.load %arg1[%c2, %c0_4, %c0_5] : memref<3x2x32xf32, #tpu.memory_space<vmem>>, vector<1x2x32xf32>
    %5 = vector.shape_cast %4 : vector<1x2x32xf32> to vector<2x32xf32>
    %c0_6 = arith.constant 0 : index
    %c0_7 = arith.constant 0 : index
    %c0_8 = arith.constant 0 : index
    %6 = vector.load %arg2[%c0_6, %c0_7, %c0_8] : memref<4x32x128xf32, #tpu.memory_space<vmem>>, vector<1x32x128xf32>
    %7 = vector.shape_cast %6 : vector<1x32x128xf32> to vector<32x128xf32>
    %c0_9 = arith.constant 0 : index
    %c0_10 = arith.constant 0 : index
    %c0_11 = arith.constant 0 : index
    %8 = vector.load %arg3[%c0_9, %c0_10, %c0_11] : memref<4x32x128xf32, #tpu.memory_space<vmem>>, vector<1x32x128xf32>
    %9 = vector.shape_cast %8 : vector<1x32x128xf32> to vector<32x128xf32>
    %c0_12 = arith.constant 0 : index
    %c0_13 = arith.constant 0 : index
    %c0_14 = arith.constant 0 : index
    %10 = vector.load %arg4[%c0_12, %c0_13, %c0_14] : memref<4x32x128xf32, #tpu.memory_space<vmem>>, vector<1x32x128xf32>
    %11 = vector.shape_cast %10 : vector<1x32x128xf32> to vector<32x128xf32>
    %c0_15 = arith.constant 0 : index
    %c0_16 = arith.constant 0 : index
    %c0_17 = arith.constant 0 : index
    %12 = vector.load %arg5[%c0_15, %c0_16, %c0_17] : memref<4x1x128xi8, #tpu.memory_space<vmem>>, vector<1x1x128xi8>
    %13 = vector.shape_cast %12 : vector<1x1x128xi8> to vector<1x128xi8>
    %c0_i8 = arith.constant 0 : i8
    %14 = vector.broadcast %c0_i8 : i8 to vector<1x128xi8>
    %15 = arith.cmpi ne, %13, %14 : vector<1x128xi8>
    %cst = arith.constant dense<0.000000e+00> : vector<2x128xf32>
    %16 = tpu.matmul %1, %7, %cst {dimension_numbers = #tpu.dot_dimension_numbers<[1], [0], [0], [1], [0, 0, 1, 1], [], []>} : vector<2x32xf32>, vector<32x128xf32>, vector<2x128xf32> -> vector<2x128xf32>
    %cst_18 = arith.constant dense<0.000000e+00> : vector<2x128xf32>
    %17 = tpu.matmul %3, %9, %cst_18 {dimension_numbers = #tpu.dot_dimension_numbers<[1], [0], [0], [1], [0, 0, 1, 1], [], []>} : vector<2x32xf32>, vector<32x128xf32>, vector<2x128xf32> -> vector<2x128xf32>
    %18 = arith.addf %16, %17 : vector<2x128xf32>
    %cst_19 = arith.constant dense<0.000000e+00> : vector<2x128xf32>
    %19 = tpu.matmul %5, %11, %cst_19 {dimension_numbers = #tpu.dot_dimension_numbers<[1], [0], [0], [1], [0, 0, 1, 1], [], []>} : vector<2x32xf32>, vector<32x128xf32>, vector<2x128xf32> -> vector<2x128xf32>
    %20 = arith.addf %18, %19 : vector<2x128xf32>
    %cst_20 = arith.constant -1.000000e+30 : f32
    %21 = vector.shape_cast %15 : vector<1x128xi1> to vector<1x128xi1>
    %22 = vector.broadcast %21 : vector<1x128xi1> to vector<2x128xi1>
    %23 = vector.broadcast %cst_20 : f32 to vector<2x128xf32>
    %24 = arith.select %22, %20, %23 : vector<2x128xi1>, vector<2x128xf32>
    %cst_21 = arith.constant dense<0xFF800000> : vector<2xf32>
    %25 = vector.multi_reduction <maximumf>, %24, %cst_21 [1] : vector<2x128xf32> to vector<2xf32>
    %26 = vector.shape_cast %25 : vector<2xf32> to vector<2x1xf32>
    %27 = vector.broadcast %26 : vector<2x1xf32> to vector<2x128xf32>
    %28 = arith.subf %24, %27 : vector<2x128xf32>
    %29 = math.exp %28 : vector<2x128xf32>
    %cst_22 = arith.constant dense<0.000000e+00> : vector<2xf32>
    %30 = vector.multi_reduction <add>, %29, %cst_22 [1] : vector<2x128xf32> to vector<2xf32>
    %31 = vector.shape_cast %30 : vector<2xf32> to vector<2x1xf32>
    %32 = math.log %31 : vector<2x1xf32>
    %33 = vector.broadcast %32 : vector<2x1xf32> to vector<2x128xf32>
    %34 = arith.subf %28, %33 : vector<2x128xf32>
    %c0_23 = arith.constant 0 : index
    %c0_24 = arith.constant 0 : index
    %c0_25 = arith.constant 0 : index
    %35 = vector.load %arg6[%c0_23, %c0_24, %c0_25] : memref<4x2x128xf32, #tpu.memory_space<vmem>>, vector<1x2x128xf32>
    %36 = vector.shape_cast %35 : vector<1x2x128xf32> to vector<2x128xf32>
    %37 = vector.shape_cast %34 : vector<2x128xf32> to vector<1x2x128xf32>
    tpu.vector_store %arg6[%c0_23, %c0_24, %c0_25], %37 {strides = array<i32>} : memref<4x2x128xf32, #tpu.memory_space<vmem>>, vector<1x2x128xf32>,
    %c1_26 = arith.constant 1 : index
    %c0_27 = arith.constant 0 : index
    %c0_28 = arith.constant 0 : index
    %38 = vector.load %arg2[%c1_26, %c0_27, %c0_28] : memref<4x32x128xf32, #tpu.memory_space<vmem>>, vector<1x32x128xf32>
    %39 = vector.shape_cast %38 : vector<1x32x128xf32> to vector<32x128xf32>
    %c1_29 = arith.constant 1 : index
    %c0_30 = arith.constant 0 : index
    %c0_31 = arith.constant 0 : index
    %40 = vector.load %arg3[%c1_29, %c0_30, %c0_31] : memref<4x32x128xf32, #tpu.memory_space<vmem>>, vector<1x32x128xf32>
    %41 = vector.shape_cast %40 : vector<1x32x128xf32> to vector<32x128xf32>
    %c1_32 = arith.constant 1 : index
    %c0_33 = arith.constant 0 : index
    %c0_34 = arith.constant 0 : index
    %42 = vector.load %arg4[%c1_32, %c0_33, %c0_34] : memref<4x32x128xf32, #tpu.memory_space<vmem>>, vector<1x32x128xf32>
    %43 = vector.shape_cast %42 : vector<1x32x128xf32> to vector<32x128xf32>
    %c1_35 = arith.constant 1 : index
    %c0_36 = arith.constant 0 : index
    %c0_37 = arith.constant 0 : index
    %44 = vector.load %arg5[%c1_35, %c0_36, %c0_37] : memref<4x1x128xi8, #tpu.memory_space<vmem>>, vector<1x1x128xi8>
    %45 = vector.shape_cast %44 : vector<1x1x128xi8> to vector<1x128xi8>
    %c0_i8_38 = arith.constant 0 : i8
    %46 = vector.broadcast %c0_i8_38 : i8 to vector<1x128xi8>
    %47 = arith.cmpi ne, %45, %46 : vector<1x128xi8>
    %cst_39 = arith.constant dense<0.000000e+00> : vector<2x128xf32>
    %48 = tpu.matmul %1, %39, %cst_39 {dimension_numbers = #tpu.dot_dimension_numbers<[1], [0], [0], [1], [0, 0, 1, 1], [], []>} : vector<2x32xf32>, vector<32x128xf32>, vector<2x128xf32> -> vector<2x128xf32>
    %cst_40 = arith.constant dense<0.000000e+00> : vector<2x128xf32>
    %49 = tpu.matmul %3, %41, %cst_40 {dimension_numbers = #tpu.dot_dimension_numbers<[1], [0], [0], [1], [0, 0, 1, 1], [], []>} : vector<2x32xf32>, vector<32x128xf32>, vector<2x128xf32> -> vector<2x128xf32>
    %50 = arith.addf %48, %49 : vector<2x128xf32>
    %cst_41 = arith.constant dense<0.000000e+00> : vector<2x128xf32>
    %51 = tpu.matmul %5, %43, %cst_41 {dimension_numbers = #tpu.dot_dimension_numbers<[1], [0], [0], [1], [0, 0, 1, 1], [], []>} : vector<2x32xf32>, vector<32x128xf32>, vector<2x128xf32> -> vector<2x128xf32>
    %52 = arith.addf %50, %51 : vector<2x128xf32>
    %cst_42 = arith.constant -1.000000e+30 : f32
    %53 = vector.shape_cast %47 : vector<1x128xi1> to vector<1x128xi1>
    %54 = vector.broadcast %53 : vector<1x128xi1> to vector<2x128xi1>
    %55 = vector.broadcast %cst_42 : f32 to vector<2x128xf32>
    %56 = arith.select %54, %52, %55 : vector<2x128xi1>, vector<2x128xf32>
    %cst_43 = arith.constant dense<0xFF800000> : vector<2xf32>
    %57 = vector.multi_reduction <maximumf>, %56, %cst_43 [1] : vector<2x128xf32> to vector<2xf32>
    %58 = vector.shape_cast %57 : vector<2xf32> to vector<2x1xf32>
    %59 = vector.broadcast %58 : vector<2x1xf32> to vector<2x128xf32>
    %60 = arith.subf %56, %59 : vector<2x128xf32>
    %61 = math.exp %60 : vector<2x128xf32>
    %cst_44 = arith.constant dense<0.000000e+00> : vector<2xf32>
    %62 = vector.multi_reduction <add>, %61, %cst_44 [1] : vector<2x128xf32> to vector<2xf32>
    %63 = vector.shape_cast %62 : vector<2xf32> to vector<2x1xf32>
    %64 = math.log %63 : vector<2x1xf32>
    %65 = vector.broadcast %64 : vector<2x1xf32> to vector<2x128xf32>
    %66 = arith.subf %60, %65 : vector<2x128xf32>
    %c1_45 = arith.constant 1 : index
    %c0_46 = arith.constant 0 : index
    %c0_47 = arith.constant 0 : index
    %67 = vector.load %arg6[%c1_45, %c0_46, %c0_47] : memref<4x2x128xf32, #tpu.memory_space<vmem>>, vector<1x2x128xf32>
    %68 = vector.shape_cast %67 : vector<1x2x128xf32> to vector<2x128xf32>
    %69 = vector.shape_cast %66 : vector<2x128xf32> to vector<1x2x128xf32>
    tpu.vector_store %arg6[%c1_45, %c0_46, %c0_47], %69 {strides = array<i32>} : memref<4x2x128xf32, #tpu.memory_space<vmem>>, vector<1x2x128xf32>,
    %c2_48 = arith.constant 2 : index
    %c0_49 = arith.constant 0 : index
    %c0_50 = arith.constant 0 : index
    %70 = vector.load %arg2[%c2_48, %c0_49, %c0_50] : memref<4x32x128xf32, #tpu.memory_space<vmem>>, vector<1x32x128xf32>
    %71 = vector.shape_cast %70 : vector<1x32x128xf32> to vector<32x128xf32>
    %c2_51 = arith.constant 2 : index
    %c0_52 = arith.constant 0 : index
    %c0_53 = arith.constant 0 : index
    %72 = vector.load %arg3[%c2_51, %c0_52, %c0_53] : memref<4x32x128xf32, #tpu.memory_space<vmem>>, vector<1x32x128xf32>
    %73 = vector.shape_cast %72 : vector<1x32x128xf32> to vector<32x128xf32>
    %c2_54 = arith.constant 2 : index
    %c0_55 = arith.constant 0 : index
    %c0_56 = arith.constant 0 : index
    %74 = vector.load %arg4[%c2_54, %c0_55, %c0_56] : memref<4x32x128xf32, #tpu.memory_space<vmem>>, vector<1x32x128xf32>
    %75 = vector.shape_cast %74 : vector<1x32x128xf32> to vector<32x128xf32>
    %c2_57 = arith.constant 2 : index
    %c0_58 = arith.constant 0 : index
    %c0_59 = arith.constant 0 : index
    %76 = vector.load %arg5[%c2_57, %c0_58, %c0_59] : memref<4x1x128xi8, #tpu.memory_space<vmem>>, vector<1x1x128xi8>
    %77 = vector.shape_cast %76 : vector<1x1x128xi8> to vector<1x128xi8>
    %c0_i8_60 = arith.constant 0 : i8
    %78 = vector.broadcast %c0_i8_60 : i8 to vector<1x128xi8>
    %79 = arith.cmpi ne, %77, %78 : vector<1x128xi8>
    %cst_61 = arith.constant dense<0.000000e+00> : vector<2x128xf32>
    %80 = tpu.matmul %1, %71, %cst_61 {dimension_numbers = #tpu.dot_dimension_numbers<[1], [0], [0], [1], [0, 0, 1, 1], [], []>} : vector<2x32xf32>, vector<32x128xf32>, vector<2x128xf32> -> vector<2x128xf32>
    %cst_62 = arith.constant dense<0.000000e+00> : vector<2x128xf32>
    %81 = tpu.matmul %3, %73, %cst_62 {dimension_numbers = #tpu.dot_dimension_numbers<[1], [0], [0], [1], [0, 0, 1, 1], [], []>} : vector<2x32xf32>, vector<32x128xf32>, vector<2x128xf32> -> vector<2x128xf32>
    %82 = arith.addf %80, %81 : vector<2x128xf32>
    %cst_63 = arith.constant dense<0.000000e+00> : vector<2x128xf32>
    %83 = tpu.matmul %5, %75, %cst_63 {dimension_numbers = #tpu.dot_dimension_numbers<[1], [0], [0], [1], [0, 0, 1, 1], [], []>} : vector<2x32xf32>, vector<32x128xf32>, vector<2x128xf32> -> vector<2x128xf32>
    %84 = arith.addf %82, %83 : vector<2x128xf32>
    %cst_64 = arith.constant -1.000000e+30 : f32
    %85 = vector.shape_cast %79 : vector<1x128xi1> to vector<1x128xi1>
    %86 = vector.broadcast %85 : vector<1x128xi1> to vector<2x128xi1>
    %87 = vector.broadcast %cst_64 : f32 to vector<2x128xf32>
    %88 = arith.select %86, %84, %87 : vector<2x128xi1>, vector<2x128xf32>
    %cst_65 = arith.constant dense<0xFF800000> : vector<2xf32>
    %89 = vector.multi_reduction <maximumf>, %88, %cst_65 [1] : vector<2x128xf32> to vector<2xf32>
    %90 = vector.shape_cast %89 : vector<2xf32> to vector<2x1xf32>
    %91 = vector.broadcast %90 : vector<2x1xf32> to vector<2x128xf32>
    %92 = arith.subf %88, %91 : vector<2x128xf32>
    %93 = math.exp %92 : vector<2x128xf32>
    %cst_66 = arith.constant dense<0.000000e+00> : vector<2xf32>
    %94 = vector.multi_reduction <add>, %93, %cst_66 [1] : vector<2x128xf32> to vector<2xf32>
    %95 = vector.shape_cast %94 : vector<2xf32> to vector<2x1xf32>
    %96 = math.log %95 : vector<2x1xf32>
    %97 = vector.broadcast %96 : vector<2x1xf32> to vector<2x128xf32>
    %98 = arith.subf %92, %97 : vector<2x128xf32>
    %c2_67 = arith.constant 2 : index
    %c0_68 = arith.constant 0 : index
    %c0_69 = arith.constant 0 : index
    %99 = vector.load %arg6[%c2_67, %c0_68, %c0_69] : memref<4x2x128xf32, #tpu.memory_space<vmem>>, vector<1x2x128xf32>
    %100 = vector.shape_cast %99 : vector<1x2x128xf32> to vector<2x128xf32>
    %101 = vector.shape_cast %98 : vector<2x128xf32> to vector<1x2x128xf32>
    tpu.vector_store %arg6[%c2_67, %c0_68, %c0_69], %101 {strides = array<i32>} : memref<4x2x128xf32, #tpu.memory_space<vmem>>, vector<1x2x128xf32>,
    %c3 = arith.constant 3 : index
    %c0_70 = arith.constant 0 : index
    %c0_71 = arith.constant 0 : index
    %102 = vector.load %arg2[%c3, %c0_70, %c0_71] : memref<4x32x128xf32, #tpu.memory_space<vmem>>, vector<1x32x128xf32>
    %103 = vector.shape_cast %102 : vector<1x32x128xf32> to vector<32x128xf32>
    %c3_72 = arith.constant 3 : index
    %c0_73 = arith.constant 0 : index
    %c0_74 = arith.constant 0 : index
    %104 = vector.load %arg3[%c3_72, %c0_73, %c0_74] : memref<4x32x128xf32, #tpu.memory_space<vmem>>, vector<1x32x128xf32>
    %105 = vector.shape_cast %104 : vector<1x32x128xf32> to vector<32x128xf32>
    %c3_75 = arith.constant 3 : index
    %c0_76 = arith.constant 0 : index
    %c0_77 = arith.constant 0 : index
    %106 = vector.load %arg4[%c3_75, %c0_76, %c0_77] : memref<4x32x128xf32, #tpu.memory_space<vmem>>, vector<1x32x128xf32>
    %107 = vector.shape_cast %106 : vector<1x32x128xf32> to vector<32x128xf32>
    %c3_78 = arith.constant 3 : index
    %c0_79 = arith.constant 0 : index
    %c0_80 = arith.constant 0 : index
    %108 = vector.load %arg5[%c3_78, %c0_79, %c0_80] : memref<4x1x128xi8, #tpu.memory_space<vmem>>, vector<1x1x128xi8>
    %109 = vector.shape_cast %108 : vector<1x1x128xi8> to vector<1x128xi8>
    %c0_i8_81 = arith.constant 0 : i8
    %110 = vector.broadcast %c0_i8_81 : i8 to vector<1x128xi8>
    %111 = arith.cmpi ne, %109, %110 : vector<1x128xi8>
    %cst_82 = arith.constant dense<0.000000e+00> : vector<2x128xf32>
    %112 = tpu.matmul %1, %103, %cst_82 {dimension_numbers = #tpu.dot_dimension_numbers<[1], [0], [0], [1], [0, 0, 1, 1], [], []>} : vector<2x32xf32>, vector<32x128xf32>, vector<2x128xf32> -> vector<2x128xf32>
    %cst_83 = arith.constant dense<0.000000e+00> : vector<2x128xf32>
    %113 = tpu.matmul %3, %105, %cst_83 {dimension_numbers = #tpu.dot_dimension_numbers<[1], [0], [0], [1], [0, 0, 1, 1], [], []>} : vector<2x32xf32>, vector<32x128xf32>, vector<2x128xf32> -> vector<2x128xf32>
    %114 = arith.addf %112, %113 : vector<2x128xf32>
    %cst_84 = arith.constant dense<0.000000e+00> : vector<2x128xf32>
    %115 = tpu.matmul %5, %107, %cst_84 {dimension_numbers = #tpu.dot_dimension_numbers<[1], [0], [0], [1], [0, 0, 1, 1], [], []>} : vector<2x32xf32>, vector<32x128xf32>, vector<2x128xf32> -> vector<2x128xf32>
    %116 = arith.addf %114, %115 : vector<2x128xf32>
    %cst_85 = arith.constant -1.000000e+30 : f32
    %117 = vector.shape_cast %111 : vector<1x128xi1> to vector<1x128xi1>
    %118 = vector.broadcast %117 : vector<1x128xi1> to vector<2x128xi1>
    %119 = vector.broadcast %cst_85 : f32 to vector<2x128xf32>
    %120 = arith.select %118, %116, %119 : vector<2x128xi1>, vector<2x128xf32>
    %cst_86 = arith.constant dense<0xFF800000> : vector<2xf32>
    %121 = vector.multi_reduction <maximumf>, %120, %cst_86 [1] : vector<2x128xf32> to vector<2xf32>
    %122 = vector.shape_cast %121 : vector<2xf32> to vector<2x1xf32>
    %123 = vector.broadcast %122 : vector<2x1xf32> to vector<2x128xf32>
    %124 = arith.subf %120, %123 : vector<2x128xf32>
    %125 = math.exp %124 : vector<2x128xf32>
    %cst_87 = arith.constant dense<0.000000e+00> : vector<2xf32>
    %126 = vector.multi_reduction <add>, %125, %cst_87 [1] : vector<2x128xf32> to vector<2xf32>
    %127 = vector.shape_cast %126 : vector<2xf32> to vector<2x1xf32>
    %128 = math.log %127 : vector<2x1xf32>
    %129 = vector.broadcast %128 : vector<2x1xf32> to vector<2x128xf32>
    %130 = arith.subf %124, %129 : vector<2x128xf32>
    %c3_88 = arith.constant 3 : index
    %c0_89 = arith.constant 0 : index
    %c0_90 = arith.constant 0 : index
    %131 = vector.load %arg6[%c3_88, %c0_89, %c0_90] : memref<4x2x128xf32, #tpu.memory_space<vmem>>, vector<1x2x128xf32>
    %132 = vector.shape_cast %131 : vector<1x2x128xf32> to vector<2x128xf32>
    %133 = vector.shape_cast %130 : vector<2x128xf32> to vector<1x2x128xf32>
    tpu.vector_store %arg6[%c3_88, %c0_89, %c0_90], %133 {strides = array<i32>} : memref<4x2x128xf32, #tpu.memory_space<vmem>>, vector<1x2x128xf32>,
    return
  }
  func.func @transform_0(%arg0: i32) -> (i32, i32, i32) {
    %c0_i32 = arith.constant 0 : i32
    %c0_i32_0 = arith.constant 0 : i32
    %c0_i32_1 = arith.constant 0 : i32
    %c0_i32_2 = arith.constant 0 : i32
    return %c0_i32, %c0_i32_0, %c0_i32_1 : i32, i32, i32
  }
  func.func @transform_1(%arg0: i32) -> (i32, i32, i32) {
    %c0_i32 = arith.constant 0 : i32
    %c0_i32_0 = arith.constant 0 : i32
    %c0_i32_1 = arith.constant 0 : i32
    return %arg0, %c0_i32, %c0_i32_0 : i32, i32, i32
  }
  func.func @transform_2(%arg0: i32) -> (i32, i32, i32) {
    %c0_i32 = arith.constant 0 : i32
    %c0_i32_0 = arith.constant 0 : i32
    %c0_i32_1 = arith.constant 0 : i32
    return %arg0, %c0_i32, %c0_i32_0 : i32, i32, i32
  }
  func.func @transform_3(%arg0: i32) -> (i32, i32, i32) {
    %c0_i32 = arith.constant 0 : i32
    %c0_i32_0 = arith.constant 0 : i32
    %c0_i32_1 = arith.constant 0 : i32
    return %arg0, %c0_i32, %c0_i32_0 : i32, i32, i32
  }
  func.func @transform_4(%arg0: i32) -> (i32, i32, i32) {
    %c0_i32 = arith.constant 0 : i32
    %c0_i32_0 = arith.constant 0 : i32
    %c0_i32_1 = arith.constant 0 : i32
    return %arg0, %c0_i32, %c0_i32_0 : i32, i32, i32
  }
  func.func @transform_5(%arg0: i32) -> (i32, i32, i32) {
    %c0_i32 = arith.constant 0 : i32
    %c0_i32_0 = arith.constant 0 : i32
    %c0_i32_1 = arith.constant 0 : i32
    return %arg0, %c0_i32, %c0_i32_0 : i32, i32, i32
  }
}

</mosaic_0001>

<llo_original>
// kernel: tpu_custom_call.1
$region0: #{tpu_custom_call.1}
  #allocation0 [shape = 'u32[]', space=smem, size = 0x4, offset = 0x4, fixed_abs, tag = 'smem constant byte address 0x4 - core index']
  #allocation1 [shape = 'u32[144,128]{1,0:T(1,128)}', space=vmem, size = 0x12000, scoped, tag = 'internal scratch']
  %s0 = inlined_call_operand.vmem [shape: f32[3,2,32], index: 0, kind: input, shape index: {}]
  %s1 = inlined_call_operand.hbm [shape: f32[8,32,128], index: 1, kind: input, shape index: {}]
  %s2 = inlined_call_operand.hbm [shape: f32[8,32,128], index: 2, kind: input, shape index: {}]
  %s3 = inlined_call_operand.hbm [shape: f32[8,32,128], index: 3, kind: input, shape index: {}]
  %s4 = inlined_call_operand.vmem [shape: s8[8,1,128], index: 4, kind: input, shape index: {}]
  %s5 = inlined_call_operand.hbm [shape: f32[8,2,128], index: 5, kind: output, shape index: {}]
  %s6 = sld [smem:[#allocation0]]
  $region65: #{tpu_custom_call.1} parent=0
    _
  %s8 = ssub.s32 1, %s6
  %s9 = scalar_select 0, %s8, %s6
  $region1: #{tpu_custom_call.1} parent=0
    #allocation2 [shape = 'u8[131072]{0}', space=vmem, size = 0x20000, scoped, tag = 'input window, operand 1']
    #allocation3 [shape = 's32[2]{0}', space=sflag, size = 0x8, scoped, tag = 'scoped memory for tpu_custom_call.1']
    #allocation4 [shape = 's32[2]{0}', space=sflag, size = 0x8, scoped, tag = 'scoped memory for tpu_custom_call.1']
    #allocation5 [shape = 'u8[131072]{0}', space=vmem, size = 0x20000, scoped, tag = 'input window, operand 2']
    #allocation6 [shape = 's32[2]{0}', space=sflag, size = 0x8, scoped, tag = 'scoped memory for tpu_custom_call.1']
    #allocation7 [shape = 'u8[131072]{0}', space=vmem, size = 0x20000, scoped, tag = 'input window, operand 3']
    #allocation8 [shape = 'u8[8192]{0}', space=vmem, size = 0x2000, scoped, tag = 'output window, operand 0']
    %10 = vsyncpa [#allocation3], 0
    %s11 = scalar_lea.sflag [#allocation3], 1
    %12 = vsyncpa %s11, 0
    %13 = vsyncpa [#allocation6], 0
    %s14 = scalar_lea.sflag [#allocation6], 1
    %15 = vsyncpa %s14, 0
    %16 = vsyncpa [#allocation4], 0
    %s17 = scalar_lea.sflag [#allocation4], 1
    %18 = vsyncpa %s17, 0
    loop: start=0, step=1, limit=4
    $region2: #{tpu_custom_call.1} parent=1 // loop_pre_header
      _
    $region3: #{tpu_custom_call.1} parent=1 // loop_header
      %s20 = sphi 0, %s24
      %p21 = scmp.ge.s32.totalorder %s20, 4
      %s28 = sphi 0, %s28
      %s30 = sphi 0, %s28
      %s31 = sphi 0, %s30
      %s45 = sphi 0, %s31
      %s51 = sphi 0, %s53
      %s54 = sphi 0, %s51
      %s55 = sphi 0, %s54
      %s71 = sphi 0, %s55
      %s77 = sphi 0, %s79
      %s80 = sphi 0, %s77
      %s81 = sphi 0, %s80
      %s97 = sphi 0, %s81
      %s103 = sphi 0, %s105
      %s106 = sphi 0, %s103
      %s107 = sphi 0, %s106
      %s123 = sphi 0, %s107
      %s129 = sphi 0, %s131
      %s132 = sphi 0, %s129
      %s133 = sphi 0, %s132
      %s149 = sphi 0, %s133
      %s155 = sphi 0, %s157
      %s158 = sphi 0, %s155
      %s159 = sphi 0, %s158
      %s175 = sphi 0, %s159
    $region4: #{tpu_custom_call.1} parent=1 // loop_header_branch
      %23 = sbr.rel (%p21) target = $region8
    $region5: #{tpu_custom_call.1} parent=1 // loop_body
      %s25 = ssub.s32 %s20, 1
      %s26 = ssub.s32 %s20, 2
      %s27 = sadd.s32 %s20, 1
      %s29 = sadd.s32 %s28, 1
      %p32 = scmp.eq.s32.totalorder %s20, 1
      %p33 = scmp.ne.s32.totalorder %s28, %s30
      %p34 = scmp.eq.s32.totalorder %s20, 0
      %p35 = por %p33, %p34
      %p36 = scmp.ne.s32.totalorder %s28, %s30
      %p37 = scmp.eq.s32.totalorder %s25, 1
      %p38 = por %p36, %p37
      %p39 = scmp.ne.s32.totalorder %s30, %s31
      %p40 = scmp.eq.s32.totalorder %s25, 0
      %p41 = por %p39, %p40
      %p42 = scmp.ne.s32.totalorder %s30, %s31
      %p43 = scmp.eq.s32.totalorder %s26, 1
      %p44 = por %p42, %p43
      %p46 = scmp.ne.s32.totalorder %s31, %s45
      %p47 = scmp.eq.s32.totalorder %s26, 0
      %p48 = por %p46, %p47
      %s49 = ssub.s32 %s20, %s27
      %p50 = scmp.eq.s32.totalorder %s49, 0
      %s52 = sadd.s32 %s51, 1
      %s53 = scalar_select %p50, %s51, %s52
      %p56 = pneg %p50
      %p57 = scmp.eq.s32.totalorder %s20, 1
      %p58 = por %p56, %p57
      %p59 = scmp.ne.s32.totalorder %s51, %s54
      %p60 = scmp.eq.s32.totalorder %s20, 0
      %p61 = por %p59, %p60
      %p62 = scmp.ne.s32.totalorder %s51, %s54
      %p63 = scmp.eq.s32.totalorder %s25, 1
      %p64 = por %p62, %p63
      %p65 = scmp.ne.s32.totalorder %s54, %s55
      %p66 = scmp.eq.s32.totalorder %s25, 0
      %p67 = por %p65, %p66
      %p68 = scmp.ne.s32.totalorder %s54, %s55
      %p69 = scmp.eq.s32.totalorder %s26, 1
      %p70 = por %p68, %p69
      %p72 = scmp.ne.s32.totalorder %s55, %s71
      %p73 = scmp.eq.s32.totalorder %s26, 0
      %p74 = por %p72, %p73
      %s75 = ssub.s32 %s20, %s27
      %p76 = scmp.eq.s32.totalorder %s75, 0
      %s78 = sadd.s32 %s77, 1
      %s79 = scalar_select %p76, %s77, %s78
      %p82 = pneg %p76
      %p83 = scmp.eq.s32.totalorder %s20, 1
      %p84 = por %p82, %p83
      %p85 = scmp.ne.s32.totalorder %s77, %s80
      %p86 = scmp.eq.s32.totalorder %s20, 0
      %p87 = por %p85, %p86
      %p88 = scmp.ne.s32.totalorder %s77, %s80
      %p89 = scmp.eq.s32.totalorder %s25, 1
      %p90 = por %p88, %p89
      %p91 = scmp.ne.s32.totalorder %s80, %s81
      %p92 = scmp.eq.s32.totalorder %s25, 0
      %p93 = por %p91, %p92
      %p94 = scmp.ne.s32.totalorder %s80, %s81
      %p95 = scmp.eq.s32.totalorder %s26, 1
      %p96 = por %p94, %p95
      %p98 = scmp.ne.s32.totalorder %s81, %s97
      %p99 = scmp.eq.s32.totalorder %s26, 0
      %p100 = por %p98, %p99
      %s101 = ssub.s32 %s20, %s27
      %p102 = scmp.eq.s32.totalorder %s101, 0
      %s104 = sadd.s32 %s103, 1
      %s105 = scalar_select %p102, %s103, %s104
      %p108 = pneg %p102
      %p109 = scmp.eq.s32.totalorder %s20, 1
      %p110 = por %p108, %p109
      %p111 = scmp.ne.s32.totalorder %s103, %s106
      %p112 = scmp.eq.s32.totalorder %s20, 0
      %p113 = por %p111, %p112
      %p114 = scmp.ne.s32.totalorder %s103, %s106
      %p115 = scmp.eq.s32.totalorder %s25, 1
      %p116 = por %p114, %p115
      %p117 = scmp.ne.s32.totalorder %s106, %s107
      %p118 = scmp.eq.s32.totalorder %s25, 0
      %p119 = por %p117, %p118
      %p120 = scmp.ne.s32.totalorder %s106, %s107
      %p121 = scmp.eq.s32.totalorder %s26, 1
      %p122 = por %p120, %p121
      %p124 = scmp.ne.s32.totalorder %s107, %s123
      %p125 = scmp.eq.s32.totalorder %s26, 0
      %p126 = por %p124, %p125
      %s127 = ssub.s32 %s20, %s27
      %p128 = scmp.eq.s32.totalorder %s127, 0
      %s130 = sadd.s32 %s129, 1
      %s131 = scalar_select %p128, %s129, %s130
      %p134 = pneg %p128
      %p135 = scmp.eq.s32.totalorder %s20, 1
      %p136 = por %p134, %p135
      %p137 = scmp.ne.s32.totalorder %s129, %s132
      %p138 = scmp.eq.s32.totalorder %s20, 0
      %p139 = por %p137, %p138
      %p140 = scmp.ne.s32.totalorder %s129, %s132
      %p141 = scmp.eq.s32.totalorder %s25, 1
      %p142 = por %p140, %p141
      %p143 = scmp.ne.s32.totalorder %s132, %s133
      %p144 = scmp.eq.s32.totalorder %s25, 0
      %p145 = por %p143, %p144
      %p146 = scmp.ne.s32.totalorder %s132, %s133
      %p147 = scmp.eq.s32.totalorder %s26, 1
      %p148 = por %p146, %p147
      %p150 = scmp.ne.s32.totalorder %s133, %s149
      %p151 = scmp.eq.s32.totalorder %s26, 0
      %p152 = por %p150, %p151
      %s153 = ssub.s32 %s20, %s27
      %p154 = scmp.eq.s32.totalorder %s153, 0
      %s156 = sadd.s32 %s155, 1
      %s157 = scalar_select %p154, %s155, %s156
      %p160 = pneg %p154
      %p161 = scmp.eq.s32.totalorder %s20, 1
      %p162 = por %p160, %p161
      %p163 = scmp.ne.s32.totalorder %s155, %s158
      %p164 = scmp.eq.s32.totalorder %s20, 0
      %p165 = por %p163, %p164
      %p166 = scmp.ne.s32.totalorder %s155, %s158
      %p167 = scmp.eq.s32.totalorder %s25, 1
      %p168 = por %p166, %p167
      %p169 = scmp.ne.s32.totalorder %s158, %s159
      %p170 = scmp.eq.s32.totalorder %s25, 0
      %p171 = por %p169, %p170
      %p172 = scmp.ne.s32.totalorder %s158, %s159
      %p173 = scmp.eq.s32.totalorder %s26, 1
      %p174 = por %p172, %p173
      %p176 = scmp.ne.s32.totalorder %s159, %s175
      %p177 = scmp.eq.s32.totalorder %s26, 0
      %p178 = por %p176, %p177
      %p179 = scmp.le.s32.totalorder 1, %s20
      %p180 = scmp.lt.s32.totalorder %s20, 3
      %p181 = pnand %p179, %p180
      %p182 = pneg %p181
      // Predicated region
      $region9: #{tpu_custom_call.1} parent=5 // pred_check
        _
      $region10: #{tpu_custom_call.1} parent=5 // pred_check_branch
        %184 = sbr.rel (%p181) target = $region12
      $region11: #{tpu_custom_call.1} parent=5 // pred_region
        %s185 = ssub.s32 %s20, 1
        // Predicated region
        $region13: #{tpu_custom_call.1} parent=11 // pred_check
          %p186 = pneg %p41
        $region14: #{tpu_custom_call.1} parent=11 // pred_check_branch
          %188 = sbr.rel (%p186) target = $region16
        $region15: #{tpu_custom_call.1} parent=11 // pred_region
          _
        $region16: #{tpu_custom_call.1} parent=11 // pred_fallthru
          _
      $region12: #{tpu_custom_call.1} parent=5 // pred_fallthru
        _
      %p189 = scmp.lt.s32.totalorder %s20, 2
      // Predicated region
      $region17: #{tpu_custom_call.1} parent=5 // pred_check
        %p190 = pneg %p189
      $region18: #{tpu_custom_call.1} parent=5 // pred_check_branch
        %192 = sbr.rel (%p190) target = $region20
      $region19: #{tpu_custom_call.1} parent=5 // pred_region
        // Predicated region
        $region21: #{tpu_custom_call.1} parent=19 // pred_check
          %p193 = pneg %p61
        $region22: #{tpu_custom_call.1} parent=19 // pred_check_branch
          %195 = sbr.rel (%p193) target = $region24
        $region23: #{tpu_custom_call.1} parent=19 // pred_region
          %s196 = sand.u32 %s51, 1
          %s197 = scalar_lea.sflag [#allocation3], %s196
          %s198 = sand.u32 %s51, 1
          %s199 = smul.addr %s198, 128
          %s200 = scalar_lea.vmem [#allocation2], %s199
          %s201 = smul.u32 4, %s20
          %s203 = ssub.s32 2048, 2048
          %204 = vsyncadd %s197, %s203
          %s205 = smul.addr %s201, 4
          %s206 = smul.addr %s205, 128
          %s207 = scalar_lea.hbm %s1, %s206
          %s208 = sshll.u32 %s200, 4
          %s209 = int_to_ptr.vmem [resolvable:$true] %s208
          %214 = dma.hbm_to_vmem [thread:$0]  %s207, 2048, %s209, %s197, 128, 128, 8
        $region24: #{tpu_custom_call.1} parent=19 // pred_fallthru
          _
        // Predicated region
        $region25: #{tpu_custom_call.1} parent=19 // pred_check
          %p215 = pneg %p87
        $region26: #{tpu_custom_call.1} parent=19 // pred_check_branch
          %217 = sbr.rel (%p215) target = $region28
        $region27: #{tpu_custom_call.1} parent=19 // pred_region
          %s218 = sand.u32 %s20, 1
          %s219 = scalar_lea.sflag [#allocation6], %s218
          %s220 = sand.u32 %s77, 1
          %s221 = smul.addr %s220, 128
          %s222 = scalar_lea.vmem [#allocation5], %s221
          %s223 = smul.u32 4, %s20
          %s225 = ssub.s32 2048, 2048
          %226 = vsyncadd %s219, %s225
          %s227 = smul.addr %s223, 4
          %s228 = smul.addr %s227, 128
          %s229 = scalar_lea.hbm %s2, %s228
          %s230 = sshll.u32 %s222, 4
          %s231 = int_to_ptr.vmem [resolvable:$true] %s230
          %236 = dma.hbm_to_vmem [thread:$0]  %s229, 2048, %s231, %s219, 128, 128, 8
        $region28: #{tpu_custom_call.1} parent=19 // pred_fallthru
          _
        // Predicated region
        $region29: #{tpu_custom_call.1} parent=19 // pred_check
          %p237 = pneg %p113
        $region30: #{tpu_custom_call.1} parent=19 // pred_check_branch
          %239 = sbr.rel (%p237) target = $region32
        $region31: #{tpu_custom_call.1} parent=19 // pred_region
          %s240 = sand.u32 %s20, 1
          %s241 = scalar_lea.sflag [#allocation6], %s240
          %s242 = sand.u32 %s103, 1
          %s243 = smul.addr %s242, 128
          %s244 = scalar_lea.vmem [#allocation7], %s243
          %s245 = smul.u32 4, %s20
          %s247 = ssub.s32 2048, 2048
          %248 = vsyncadd %s241, %s247
          %s249 = smul.addr %s245, 4
          %s250 = smul.addr %s249, 128
          %s251 = scalar_lea.hbm %s3, %s250
          %s252 = sshll.u32 %s244, 4
          %s253 = int_to_ptr.vmem [resolvable:$true] %s252
          %258 = dma.hbm_to_vmem [thread:$0]  %s251, 2048, %s253, %s241, 128, 128, 8
        $region32: #{tpu_custom_call.1} parent=19 // pred_fallthru
          _
        // Predicated region
        $region33: #{tpu_custom_call.1} parent=19 // pred_check
          %p259 = pneg %p139
        $region34: #{tpu_custom_call.1} parent=19 // pred_check_branch
          %261 = sbr.rel (%p259) target = $region36
        $region35: #{tpu_custom_call.1} parent=19 // pred_region
          %s262 = smul.u32 4, %s20
          %p263 = scmp.lt.s32.totalorder %s262, 7
          %s264 = scalar_select %p263, %s262, 7
          %s265 = scalar_lea.vmem %s4, %s264
          %s266 = smul.u32 4, %s20
        $region36: #{tpu_custom_call.1} parent=19 // pred_fallthru
          _
      $region20: #{tpu_custom_call.1} parent=5 // pred_fallthru
        _
      %p267 = scmp.le.s32.totalorder 1, %s20
      %p268 = scmp.lt.s32.totalorder %s20, 3
      %p269 = pnand %p267, %p268
      %p270 = pneg %p269
      // Predicated region
      $region37: #{tpu_custom_call.1} parent=5 // pred_check
        _
      $region38: #{tpu_custom_call.1} parent=5 // pred_check_branch
        %272 = sbr.rel (%p269) target = $region40
      $region39: #{tpu_custom_call.1} parent=5 // pred_region
        %s273 = ssub.s32 %s20, 1
        %s274 = sand.u32 %s54, 1
        %s275 = scalar_lea.sflag [#allocation3], %s274
        %s276 = sand.u32 %s54, 1
        %s277 = smul.addr %s276, 128
        %s278 = scalar_lea.vmem [#allocation2], %s277
        // Predicated region
        $region41: #{tpu_custom_call.1} parent=39 // pred_check
          %p279 = pneg %p67
        $region42: #{tpu_custom_call.1} parent=39 // pred_check_branch
          %281 = sbr.rel (%p279) target = $region44
        $region43: #{tpu_custom_call.1} parent=39 // pred_region
          %282 = dma.done %s275, 2048
        $region44: #{tpu_custom_call.1} parent=39 // pred_fallthru
          _
        %s283 = sand.u32 %s25, 1
        %s284 = scalar_lea.sflag [#allocation6], %s283
        %s285 = sand.u32 %s80, 1
        %s286 = smul.addr %s285, 128
        %s287 = scalar_lea.vmem [#allocation5], %s286
        // Predicated region
        $region45: #{tpu_custom_call.1} parent=39 // pred_check
          %p288 = pneg %p93
        $region46: #{tpu_custom_call.1} parent=39 // pred_check_branch
          %290 = sbr.rel (%p288) target = $region48
        $region47: #{tpu_custom_call.1} parent=39 // pred_region
          %291 = dma.done %s284, 2048
        $region48: #{tpu_custom_call.1} parent=39 // pred_fallthru
          _
        %s292 = sand.u32 %s25, 1
        %s293 = scalar_lea.sflag [#allocation6], %s292
        %s294 = sand.u32 %s106, 1
        %s295 = smul.addr %s294, 128
        %s296 = scalar_lea.vmem [#allocation7], %s295
        // Predicated region
        $region49: #{tpu_custom_call.1} parent=39 // pred_check
          %p297 = pneg %p119
        $region50: #{tpu_custom_call.1} parent=39 // pred_check_branch
          %299 = sbr.rel (%p297) target = $region52
        $region51: #{tpu_custom_call.1} parent=39 // pred_region
          %300 = dma.done %s293, 2048
        $region52: #{tpu_custom_call.1} parent=39 // pred_fallthru
          _
        %p301 = pneg %p41
        %p302 = pneg %p38
        %s303 = sand.u32 %s54, 1
        %s304 = scalar_lea.sflag [#allocation3], %s303
        %s305 = sand.u32 %s54, 1
        %s306 = smul.addr %s305, 128
        %s307 = scalar_lea.vmem [#allocation2], %s306
        %p308 = pneg %p67
        %p309 = pneg %p64
        %s310 = sand.u32 %s25, 1
        %s311 = scalar_lea.sflag [#allocation6], %s310
        %s312 = sand.u32 %s80, 1
        %s313 = smul.addr %s312, 128
        %s314 = scalar_lea.vmem [#allocation5], %s313
        %p315 = pneg %p93
        %p316 = pneg %p90
        %s317 = sand.u32 %s25, 1
        %s318 = scalar_lea.sflag [#allocation6], %s317
        %s319 = sand.u32 %s106, 1
        %s320 = smul.addr %s319, 128
        %s321 = scalar_lea.vmem [#allocation7], %s320
        %p322 = pneg %p119
        %p323 = pneg %p116
        %s324 = smul.u32 4, %s25
        %p325 = scmp.lt.s32.totalorder %s324, 7
        %s326 = scalar_select %p325, %s324, 7
        %s327 = scalar_lea.vmem %s4, %s326
        %p328 = pneg %p145
        %p329 = pneg %p142
        %p330 = pneg %p171
        %p331 = pneg %p168
        %s332 = sand.u32 %s158, 1
        %s333 = scalar_lea.sflag [#allocation4], %s332
        %s334 = sand.u32 %s158, 1
        %s335 = smul.addr %s334, 8
        %s336 = scalar_lea.vmem [#allocation8], %s335
        %s337 = smul.u32 4, %s25
        %s338 = smul.u32 4, %s25
        %s339 = smul.u32 4, %s25
        %s340 = smul.u32 4, %s25
        %p341 = scmp.lt.s32.totalorder %s340, 7
        %s342 = scalar_select %p341, %s340, 7
        %s343 = scalar_lea.vmem %s4, %s342
        %s344 = smul.u32 4, %s25
        %s345 = smul.u32 4, %s25
        %v348 = vld [vmem:[%s0] sm:$0x3]
        %s349 = scalar_lea.vmem %s0, 2
        %v350 = vld [vmem:[%s349] sm:$0x3]
        %s351 = scalar_lea.vmem %s0, 4
        %v352 = vld [vmem:[%s351] sm:$0x3]
        %v353 = vld [vmem:[%s278] sm:$0xff]
        %v354 = vld [vmem:[%s278 + $0x8] sm:$0xff]
        %v355 = vld [vmem:[%s278 + $0x10] sm:$0xff]
        %v356 = vld [vmem:[%s278 + $0x18] sm:$0xff]
        %v357 = vld [vmem:[%s287] sm:$0xff]
        %v358 = vld [vmem:[%s287 + $0x8] sm:$0xff]
        %v359 = vld [vmem:[%s287 + $0x10] sm:$0xff]
        %v360 = vld [vmem:[%s287 + $0x18] sm:$0xff]
        %v361 = vld [vmem:[%s296] sm:$0xff]
        %v362 = vld [vmem:[%s296 + $0x8] sm:$0xff]
        %v363 = vld [vmem:[%s296 + $0x10] sm:$0xff]
        %v364 = vld [vmem:[%s296 + $0x18] sm:$0xff]
        %v365 = vld [vmem:[%s343] sm:$0x1]
        %vm366 = vnez %v365
        %vm367 = vcmask 261120
        %v369 = vsel %vm367, %v350, 0
        %371 = vmatprep.subr.mxu0 0.0
        %372 = vmatpush1.msra.mxu0 %v357
        %373 = vmatprep.subr.mxu0 0.0
        %374 = vmatpush1.msra.mxu0 %v358
        %375 = vmatprep.subr.mxu0 0.0
        %376 = vmatpush1.msra.mxu0 %v359
        %377 = vmatprep.subr.mxu0 0.0
        %378 = vmatpush1.msra.mxu0 %v360
        %379 = vmatprep.subr.mxu0 0.0
        %380 = vmatpush1.msra.mxu0 0.0
        %381 = vmatprep.subr.mxu0 0.0
        %382 = vmatpush1.msra.mxu0 0.0
        %383 = vmatprep.subr.mxu0 0.0
        %384 = vmatpush1.msra.mxu0 0.0
        %385 = vmatprep.subr.mxu0 0.0
        %386 = vmatpush1.msra.mxu0 0.0
        %387 = vmatprep.subr.mxu0 0.0
        %388 = vmatpush1.msra.mxu0 0.0
        %389 = vmatprep.subr.mxu0 0.0
        %390 = vmatpush1.msra.mxu0 0.0
        %391 = vmatprep.subr.mxu0 0.0
        %392 = vmatpush1.msra.mxu0 0.0
        %393 = vmatprep.subr.mxu0 0.0
        %394 = vmatpush1.msra.mxu0 0.0
        %395 = vmatprep.subr.mxu0 0.0
        %396 = vmatpush1.msra.mxu0 0.0
        %397 = vmatprep.subr.mxu0 0.0
        %398 = vmatpush1.msra.mxu0 0.0
        %399 = vmatprep.subr.mxu0 0.0
        %400 = vmatpush1.msra.mxu0 0.0
        %401 = vmatprep.subr.mxu0 0.0
        %402 = vmatpush1.msra.mxu0 0.0
        %403 = vmatprep.subr.mxu0 0.0
        %404 = vmatpush1.msra.mxu0 0.0
        %405 = vmatprep.subr.mxu0 0.0
        %406 = vmatpush1.msra.mxu0 0.0
        %407 = vmatprep.subr.mxu0 0.0
        %408 = vmatpush1.msra.mxu0 0.0
        %409 = vmatprep.subr.mxu0 0.0
        %410 = vmatpush1.msra.mxu0 0.0
        %411 = vmatprep.subr.mxu0 0.0
        %412 = vmatpush1.msra.mxu0 0.0
        %413 = vmatprep.subr.mxu0 0.0
        %414 = vmatpush1.msra.mxu0 0.0
        %415 = vmatprep.subr.mxu0 0.0
        %416 = vmatpush1.msra.mxu0 0.0
        %417 = vmatprep.subr.mxu0 0.0
        %418 = vmatpush1.msra.mxu0 0.0
        %419 = vmatprep.subr.mxu0 0.0
        %420 = vmatpush1.msra.mxu0 0.0
        %421 = vmatprep.subr.mxu0 0.0
        %422 = vmatpush1.msra.mxu0 0.0
        %423 = vmatprep.subr.mxu0 0.0
        %424 = vmatpush1.msra.mxu0 0.0
        %425 = vmatprep.subr.mxu0 0.0
        %426 = vmatpush1.msra.mxu0 0.0
        %427 = vmatprep.subr.mxu0 0.0
        %428 = vmatpush1.msra.mxu0 0.0
        %429 = vmatprep.subr.mxu0 0.0
        %430 = vmatpush1.msra.mxu0 0.0
        %431 = vmatprep.subr.mxu0 0.0
        %432 = vmatpush1.msra.mxu0 0.0
        %433 = vmatprep.subr.mxu0 0.0
        %434 = vmatpush1.msra.mxu0 0.0
        %435 = vmatprep.mubr.f32.mxu0 0.0
        %436 = vmatmul.mubr.f32.gmra.mrb[0].mxu0 %v369
        %v437 = vpop.f32.mrb[0].mxu0
        %v438 = vadd.f32 0.0, %v437
        %v439 = vpop.f32.mrb[0].mxu0
        %440 = vdwg.mxu0
        %v442 = vsel %vm367, %v348, 0
        %444 = vmatprep.subr.mxu0 0.0
        %445 = vmatpush1.msra.mxu0 %v353
        %446 = vmatprep.subr.mxu0 0.0
        %447 = vmatpush1.msra.mxu0 %v354
        %448 = vmatprep.subr.mxu0 0.0
        %449 = vmatpush1.msra.mxu0 %v355
        %450 = vmatprep.subr.mxu0 0.0
        %451 = vmatpush1.msra.mxu0 %v356
        %452 = vmatprep.subr.mxu0 0.0
        %453 = vmatpush1.msra.mxu0 0.0
        %454 = vmatprep.subr.mxu0 0.0
        %455 = vmatpush1.msra.mxu0 0.0
        %456 = vmatprep.subr.mxu0 0.0
        %457 = vmatpush1.msra.mxu0 0.0
        %458 = vmatprep.subr.mxu0 0.0
        %459 = vmatpush1.msra.mxu0 0.0
        %460 = vmatprep.subr.mxu0 0.0
        %461 = vmatpush1.msra.mxu0 0.0
        %462 = vmatprep.subr.mxu0 0.0
        %463 = vmatpush1.msra.mxu0 0.0
        %464 = vmatprep.subr.mxu0 0.0
        %465 = vmatpush1.msra.mxu0 0.0
        %466 = vmatprep.subr.mxu0 0.0
        %467 = vmatpush1.msra.mxu0 0.0
        %468 = vmatprep.subr.mxu0 0.0
        %469 = vmatpush1.msra.mxu0 0.0
        %470 = vmatprep.subr.mxu0 0.0
        %471 = vmatpush1.msra.mxu0 0.0
        %472 = vmatprep.subr.mxu0 0.0
        %473 = vmatpush1.msra.mxu0 0.0
        %474 = vmatprep.subr.mxu0 0.0
        %475 = vmatpush1.msra.mxu0 0.0
        %476 = vmatprep.subr.mxu0 0.0
        %477 = vmatpush1.msra.mxu0 0.0
        %478 = vmatprep.subr.mxu0 0.0
        %479 = vmatpush1.msra.mxu0 0.0
        %480 = vmatprep.subr.mxu0 0.0
        %481 = vmatpush1.msra.mxu0 0.0
        %482 = vmatprep.subr.mxu0 0.0
        %483 = vmatpush1.msra.mxu0 0.0
        %484 = vmatprep.subr.mxu0 0.0
        %485 = vmatpush1.msra.mxu0 0.0
        %486 = vmatprep.subr.mxu0 0.0
        %487 = vmatpush1.msra.mxu0 0.0
        %488 = vmatprep.subr.mxu0 0.0
        %489 = vmatpush1.msra.mxu0 0.0
        %490 = vmatprep.subr.mxu0 0.0
        %491 = vmatpush1.msra.mxu0 0.0
        %492 = vmatprep.subr.mxu0 0.0
        %493 = vmatpush1.msra.mxu0 0.0
        %494 = vmatprep.subr.mxu0 0.0
        %495 = vmatpush1.msra.mxu0 0.0
        %496 = vmatprep.subr.mxu0 0.0
        %497 = vmatpush1.msra.mxu0 0.0
        %498 = vmatprep.subr.mxu0 0.0
        %499 = vmatpush1.msra.mxu0 0.0
        %500 = vmatprep.subr.mxu0 0.0
        %501 = vmatpush1.msra.mxu0 0.0
        %502 = vmatprep.subr.mxu0 0.0
        %503 = vmatpush1.msra.mxu0 0.0
        %504 = vmatprep.subr.mxu0 0.0
        %505 = vmatpush1.msra.mxu0 0.0
        %506 = vmatprep.subr.mxu0 0.0
        %507 = vmatpush1.msra.mxu0 0.0
        %508 = vmatprep.mubr.f32.mxu0 0.0
        %509 = vmatmul.mubr.f32.gmra.mrb[0].mxu0 %v442
        %v510 = vpop.f32.mrb[0].mxu0
        %v511 = vadd.f32 %v438, %v510
        %v512 = vpop.f32.mrb[0].mxu0
        %513 = vdwg.mxu0
        %v515 = vsel %vm367, %v352, 0
        %517 = vmatprep.subr.mxu0 0.0
        %518 = vmatpush1.msra.mxu0 %v361
        %519 = vmatprep.subr.mxu0 0.0
        %520 = vmatpush1.msra.mxu0 %v362
        %521 = vmatprep.subr.mxu0 0.0
        %522 = vmatpush1.msra.mxu0 %v363
        %523 = vmatprep.subr.mxu0 0.0
        %524 = vmatpush1.msra.mxu0 %v364
        %525 = vmatprep.subr.mxu0 0.0
        %526 = vmatpush1.msra.mxu0 0.0
        %527 = vmatprep.subr.mxu0 0.0
        %528 = vmatpush1.msra.mxu0 0.0
        %529 = vmatprep.subr.mxu0 0.0
        %530 = vmatpush1.msra.mxu0 0.0
        %531 = vmatprep.subr.mxu0 0.0
        %532 = vmatpush1.msra.mxu0 0.0
        %533 = vmatprep.subr.mxu0 0.0
        %534 = vmatpush1.msra.mxu0 0.0
        %535 = vmatprep.subr.mxu0 0.0
        %536 = vmatpush1.msra.mxu0 0.0
        %537 = vmatprep.subr.mxu0 0.0
        %538 = vmatpush1.msra.mxu0 0.0
        %539 = vmatprep.subr.mxu0 0.0
        %540 = vmatpush1.msra.mxu0 0.0
        %541 = vmatprep.subr.mxu0 0.0
        %542 = vmatpush1.msra.mxu0 0.0
        %543 = vmatprep.subr.mxu0 0.0
        %544 = vmatpush1.msra.mxu0 0.0
        %545 = vmatprep.subr.mxu0 0.0
        %546 = vmatpush1.msra.mxu0 0.0
        %547 = vmatprep.subr.mxu0 0.0
        %548 = vmatpush1.msra.mxu0 0.0
        %549 = vmatprep.subr.mxu0 0.0
        %550 = vmatpush1.msra.mxu0 0.0
        %551 = vmatprep.subr.mxu0 0.0
        %552 = vmatpush1.msra.mxu0 0.0
        %553 = vmatprep.subr.mxu0 0.0
        %554 = vmatpush1.msra.mxu0 0.0
        %555 = vmatprep.subr.mxu0 0.0
        %556 = vmatpush1.msra.mxu0 0.0
        %557 = vmatprep.subr.mxu0 0.0
        %558 = vmatpush1.msra.mxu0 0.0
        %559 = vmatprep.subr.mxu0 0.0
        %560 = vmatpush1.msra.mxu0 0.0
        %561 = vmatprep.subr.mxu0 0.0
        %562 = vmatpush1.msra.mxu0 0.0
        %563 = vmatprep.subr.mxu0 0.0
        %564 = vmatpush1.msra.mxu0 0.0
        %565 = vmatprep.subr.mxu0 0.0
        %566 = vmatpush1.msra.mxu0 0.0
        %567 = vmatprep.subr.mxu0 0.0
        %568 = vmatpush1.msra.mxu0 0.0
        %569 = vmatprep.subr.mxu0 0.0
        %570 = vmatpush1.msra.mxu0 0.0
        %571 = vmatprep.subr.mxu0 0.0
        %572 = vmatpush1.msra.mxu0 0.0
        %573 = vmatprep.subr.mxu0 0.0
        %574 = vmatpush1.msra.mxu0 0.0
        %575 = vmatprep.subr.mxu0 0.0
        %576 = vmatpush1.msra.mxu0 0.0
        %577 = vmatprep.subr.mxu0 0.0
        %578 = vmatpush1.msra.mxu0 0.0
        %579 = vmatprep.subr.mxu0 0.0
        %580 = vmatpush1.msra.mxu0 0.0
        %581 = vmatprep.mubr.f32.mxu0 0.0
        %582 = vmatmul.mubr.f32.gmra.mrb[0].mxu0 %v515
        %v583 = vpop.f32.mrb[0].mxu0
        %v584 = vadd.f32 0.0, %v583
        %v585 = vpop.f32.mrb[0].mxu0
        %586 = vdwg.mxu0
        %v587 = vadd.f32 %v511, %v584
        %v588 = vsel %vm366, 16843009, 0
        %v589 = vunpack.c.0.s8 %v588
        %vm590 = vcmp.ne.s32.totalorder %v589, 0
        %v591 = vsel %vm590, 1, 0
        %v592 = vlaneseq
        %v593 = vshrl.u32 %v592, 7
        %v594 = vsub.s32 0, %v593
        %v595 = vrot.slane %v591, %v594
        %vm596 = vcmp.eq.s32.totalorder %v595, 1
        %v597 = vsel %vm596, %v587, -1e+30
        %vm598 = vcmask 1041408
        %v599 = vsel %vm598, %v597, -inf
        %600 = vmax.xlane.f32.xlu0 %v599
        %v601 = vpop.xlane.xlu0 %600
        %v602 = vsub.f32 %v597, %v601
        %v603 = vmul.f32 %v602, 1.442695
        %v604 = vpow.pop %v603
        %v605 = vsel %vm598, %v604, 0.0
        %606 = vadd.xlane.f32.xlu0 %v605
        %v607 = vpop.xlane.xlu0 %606
        %v608 = vlog2.pop %v607
        %v609 = vmul.f32 %v608, 0.6931472
        %v610 = vsub.f32 %v602, %v609
        %611 = vst [vmem:[%s336] sm:$0x3] %v610
        %s612 = scalar_lea.vmem %s278, 32 [#allocation2]
        %v613 = vld [vmem:[%s612] sm:$0xff]
        %v614 = vld [vmem:[%s612 + $0x8] sm:$0xff]
        %v615 = vld [vmem:[%s612 + $0x10] sm:$0xff]
        %v616 = vld [vmem:[%s612 + $0x18] sm:$0xff]
        %s617 = scalar_lea.vmem %s287, 32 [#allocation5]
        %v618 = vld [vmem:[%s617] sm:$0xff]
        %v619 = vld [vmem:[%s617 + $0x8] sm:$0xff]
        %v620 = vld [vmem:[%s617 + $0x10] sm:$0xff]
        %v621 = vld [vmem:[%s617 + $0x18] sm:$0xff]
        %s622 = scalar_lea.vmem %s296, 32 [#allocation7]
        %v623 = vld [vmem:[%s622] sm:$0xff]
        %v624 = vld [vmem:[%s622 + $0x8] sm:$0xff]
        %v625 = vld [vmem:[%s622 + $0x10] sm:$0xff]
        %v626 = vld [vmem:[%s622 + $0x18] sm:$0xff]
        %s627 = scalar_lea.vmem %s343, 1
        %v628 = vld [vmem:[%s627] sm:$0x1]
        %vm629 = vnez %v628
        %630 = vmatprep.subr.mxu0 0.0
        %631 = vmatpush1.msra.mxu0 %v618
        %632 = vmatprep.subr.mxu0 0.0
        %633 = vmatpush1.msra.mxu0 %v619
        %634 = vmatprep.subr.mxu0 0.0
        %635 = vmatpush1.msra.mxu0 %v620
        %636 = vmatprep.subr.mxu0 0.0
        %637 = vmatpush1.msra.mxu0 %v621
        %638 = vmatprep.subr.mxu0 0.0
        %639 = vmatpush1.msra.mxu0 0.0
        %640 = vmatprep.subr.mxu0 0.0
        %641 = vmatpush1.msra.mxu0 0.0
        %642 = vmatprep.subr.mxu0 0.0
        %643 = vmatpush1.msra.mxu0 0.0
        %644 = vmatprep.subr.mxu0 0.0
        %645 = vmatpush1.msra.mxu0 0.0
        %646 = vmatprep.subr.mxu0 0.0
        %647 = vmatpush1.msra.mxu0 0.0
        %648 = vmatprep.subr.mxu0 0.0
        %649 = vmatpush1.msra.mxu0 0.0
        %650 = vmatprep.subr.mxu0 0.0
        %651 = vmatpush1.msra.mxu0 0.0
        %652 = vmatprep.subr.mxu0 0.0
        %653 = vmatpush1.msra.mxu0 0.0
        %654 = vmatprep.subr.mxu0 0.0
        %655 = vmatpush1.msra.mxu0 0.0
        %656 = vmatprep.subr.mxu0 0.0
        %657 = vmatpush1.msra.mxu0 0.0
        %658 = vmatprep.subr.mxu0 0.0
        %659 = vmatpush1.msra.mxu0 0.0
        %660 = vmatprep.subr.mxu0 0.0
        %661 = vmatpush1.msra.mxu0 0.0
        %662 = vmatprep.subr.mxu0 0.0
        %663 = vmatpush1.msra.mxu0 0.0
        %664 = vmatprep.subr.mxu0 0.0
        %665 = vmatpush1.msra.mxu0 0.0
        %666 = vmatprep.subr.mxu0 0.0
        %667 = vmatpush1.msra.mxu0 0.0
        %668 = vmatprep.subr.mxu0 0.0
        %669 = vmatpush1.msra.mxu0 0.0
        %670 = vmatprep.subr.mxu0 0.0
        %671 = vmatpush1.msra.mxu0 0.0
        %672 = vmatprep.subr.mxu0 0.0
        %673 = vmatpush1.msra.mxu0 0.0
        %674 = vmatprep.subr.mxu0 0.0
        %675 = vmatpush1.msra.mxu0 0.0
        %676 = vmatprep.subr.mxu0 0.0
        %677 = vmatpush1.msra.mxu0 0.0
        %678 = vmatprep.subr.mxu0 0.0
        %679 = vmatpush1.msra.mxu0 0.0
        %680 = vmatprep.subr.mxu0 0.0
        %681 = vmatpush1.msra.mxu0 0.0
        %682 = vmatprep.subr.mxu0 0.0
        %683 = vmatpush1.msra.mxu0 0.0
        %684 = vmatprep.subr.mxu0 0.0
        %685 = vmatpush1.msra.mxu0 0.0
        %686 = vmatprep.subr.mxu0 0.0
        %687 = vmatpush1.msra.mxu0 0.0
        %688 = vmatprep.subr.mxu0 0.0
        %689 = vmatpush1.msra.mxu0 0.0
        %690 = vmatprep.subr.mxu0 0.0
        %691 = vmatpush1.msra.mxu0 0.0
        %692 = vmatprep.subr.mxu0 0.0
        %693 = vmatpush1.msra.mxu0 0.0
        %694 = vmatprep.mubr.f32.mxu0 0.0
        %695 = vmatmul.mubr.f32.gmra.mrb[0].mxu0 %v369
        %v696 = vpop.f32.mrb[0].mxu0
        %v697 = vadd.f32 0.0, %v696
        %v698 = vpop.f32.mrb[0].mxu0
        %699 = vdwg.mxu0
        %700 = vmatprep.subr.mxu0 0.0
        %701 = vmatpush1.msra.mxu0 %v613
        %702 = vmatprep.subr.mxu0 0.0
        %703 = vmatpush1.msra.mxu0 %v614
        %704 = vmatprep.subr.mxu0 0.0
        %705 = vmatpush1.msra.mxu0 %v615
        %706 = vmatprep.subr.mxu0 0.0
        %707 = vmatpush1.msra.mxu0 %v616
        %708 = vmatprep.subr.mxu0 0.0
        %709 = vmatpush1.msra.mxu0 0.0
        %710 = vmatprep.subr.mxu0 0.0
        %711 = vmatpush1.msra.mxu0 0.0
        %712 = vmatprep.subr.mxu0 0.0
        %713 = vmatpush1.msra.mxu0 0.0
        %714 = vmatprep.subr.mxu0 0.0
        %715 = vmatpush1.msra.mxu0 0.0
        %716 = vmatprep.subr.mxu0 0.0
        %717 = vmatpush1.msra.mxu0 0.0
        %718 = vmatprep.subr.mxu0 0.0
        %719 = vmatpush1.msra.mxu0 0.0
        %720 = vmatprep.subr.mxu0 0.0
        %721 = vmatpush1.msra.mxu0 0.0
        %722 = vmatprep.subr.mxu0 0.0
        %723 = vmatpush1.msra.mxu0 0.0
        %724 = vmatprep.subr.mxu0 0.0
        %725 = vmatpush1.msra.mxu0 0.0
        %726 = vmatprep.subr.mxu0 0.0
        %727 = vmatpush1.msra.mxu0 0.0
        %728 = vmatprep.subr.mxu0 0.0
        %729 = vmatpush1.msra.mxu0 0.0
        %730 = vmatprep.subr.mxu0 0.0
        %731 = vmatpush1.msra.mxu0 0.0
        %732 = vmatprep.subr.mxu0 0.0
        %733 = vmatpush1.msra.mxu0 0.0
        %734 = vmatprep.subr.mxu0 0.0
        %735 = vmatpush1.msra.mxu0 0.0
        %736 = vmatprep.subr.mxu0 0.0
        %737 = vmatpush1.msra.mxu0 0.0
        %738 = vmatprep.subr.mxu0 0.0
        %739 = vmatpush1.msra.mxu0 0.0
        %740 = vmatprep.subr.mxu0 0.0
        %741 = vmatpush1.msra.mxu0 0.0
        %742 = vmatprep.subr.mxu0 0.0
        %743 = vmatpush1.msra.mxu0 0.0
        %744 = vmatprep.subr.mxu0 0.0
        %745 = vmatpush1.msra.mxu0 0.0
        %746 = vmatprep.subr.mxu0 0.0
        %747 = vmatpush1.msra.mxu0 0.0
        %748 = vmatprep.subr.mxu0 0.0
        %749 = vmatpush1.msra.mxu0 0.0
        %750 = vmatprep.subr.mxu0 0.0
        %751 = vmatpush1.msra.mxu0 0.0
        %752 = vmatprep.subr.mxu0 0.0
        %753 = vmatpush1.msra.mxu0 0.0
        %754 = vmatprep.subr.mxu0 0.0
        %755 = vmatpush1.msra.mxu0 0.0
        %756 = vmatprep.subr.mxu0 0.0
        %757 = vmatpush1.msra.mxu0 0.0
        %758 = vmatprep.subr.mxu0 0.0
        %759 = vmatpush1.msra.mxu0 0.0
        %760 = vmatprep.subr.mxu0 0.0
        %761 = vmatpush1.msra.mxu0 0.0
        %762 = vmatprep.subr.mxu0 0.0
        %763 = vmatpush1.msra.mxu0 0.0
        %764 = vmatprep.mubr.f32.mxu0 0.0
        %765 = vmatmul.mubr.f32.gmra.mrb[0].mxu0 %v442
        %v766 = vpop.f32.mrb[0].mxu0
        %v767 = vadd.f32 %v697, %v766
        %v768 = vpop.f32.mrb[0].mxu0
        %769 = vdwg.mxu0
        %770 = vmatprep.subr.mxu0 0.0
        %771 = vmatpush1.msra.mxu0 %v623
        %772 = vmatprep.subr.mxu0 0.0
        %773 = vmatpush1.msra.mxu0 %v624
        %774 = vmatprep.subr.mxu0 0.0
        %775 = vmatpush1.msra.mxu0 %v625
        %776 = vmatprep.subr.mxu0 0.0
        %777 = vmatpush1.msra.mxu0 %v626
        %778 = vmatprep.subr.mxu0 0.0
        %779 = vmatpush1.msra.mxu0 0.0
        %780 = vmatprep.subr.mxu0 0.0
        %781 = vmatpush1.msra.mxu0 0.0
        %782 = vmatprep.subr.mxu0 0.0
        %783 = vmatpush1.msra.mxu0 0.0
        %784 = vmatprep.subr.mxu0 0.0
        %785 = vmatpush1.msra.mxu0 0.0
        %786 = vmatprep.subr.mxu0 0.0
        %787 = vmatpush1.msra.mxu0 0.0
        %788 = vmatprep.subr.mxu0 0.0
        %789 = vmatpush1.msra.mxu0 0.0
        %790 = vmatprep.subr.mxu0 0.0
        %791 = vmatpush1.msra.mxu0 0.0
        %792 = vmatprep.subr.mxu0 0.0
        %793 = vmatpush1.msra.mxu0 0.0
        %794 = vmatprep.subr.mxu0 0.0
        %795 = vmatpush1.msra.mxu0 0.0
        %796 = vmatprep.subr.mxu0 0.0
        %797 = vmatpush1.msra.mxu0 0.0
        %798 = vmatprep.subr.mxu0 0.0
        %799 = vmatpush1.msra.mxu0 0.0
        %800 = vmatprep.subr.mxu0 0.0
        %801 = vmatpush1.msra.mxu0 0.0
        %802 = vmatprep.subr.mxu0 0.0
        %803 = vmatpush1.msra.mxu0 0.0
        %804 = vmatprep.subr.mxu0 0.0
        %805 = vmatpush1.msra.mxu0 0.0
        %806 = vmatprep.subr.mxu0 0.0
        %807 = vmatpush1.msra.mxu0 0.0
        %808 = vmatprep.subr.mxu0 0.0
        %809 = vmatpush1.msra.mxu0 0.0
        %810 = vmatprep.subr.mxu0 0.0
        %811 = vmatpush1.msra.mxu0 0.0
        %812 = vmatprep.subr.mxu0 0.0
        %813 = vmatpush1.msra.mxu0 0.0
        %814 = vmatprep.subr.mxu0 0.0
        %815 = vmatpush1.msra.mxu0 0.0
        %816 = vmatprep.subr.mxu0 0.0
        %817 = vmatpush1.msra.mxu0 0.0
        %818 = vmatprep.subr.mxu0 0.0
        %819 = vmatpush1.msra.mxu0 0.0
        %820 = vmatprep.subr.mxu0 0.0
        %821 = vmatpush1.msra.mxu0 0.0
        %822 = vmatprep.subr.mxu0 0.0
        %823 = vmatpush1.msra.mxu0 0.0
        %824 = vmatprep.subr.mxu0 0.0
        %825 = vmatpush1.msra.mxu0 0.0
        %826 = vmatprep.subr.mxu0 0.0
        %827 = vmatpush1.msra.mxu0 0.0
        %828 = vmatprep.subr.mxu0 0.0
        %829 = vmatpush1.msra.mxu0 0.0
        %830 = vmatprep.subr.mxu0 0.0
        %831 = vmatpush1.msra.mxu0 0.0
        %832 = vmatprep.subr.mxu0 0.0
        %833 = vmatpush1.msra.mxu0 0.0
        %834 = vmatprep.mubr.f32.mxu0 0.0
        %835 = vmatmul.mubr.f32.gmra.mrb[0].mxu0 %v515
        %v836 = vpop.f32.mrb[0].mxu0
        %v837 = vadd.f32 0.0, %v836
        %v838 = vpop.f32.mrb[0].mxu0
        %839 = vdwg.mxu0
        %v840 = vadd.f32 %v767, %v837
        %v841 = vsel %vm629, 16843009, 0
        %v842 = vunpack.c.0.s8 %v841
        %vm843 = vcmp.ne.s32.totalorder %v842, 0
        %v844 = vsel %vm843, 1, 0
        %v845 = vlaneseq
        %v846 = vshrl.u32 %v845, 7
        %v847 = vsub.s32 0, %v846
        %v848 = vrot.slane %v844, %v847
        %vm849 = vcmp.eq.s32.totalorder %v848, 1
        %v850 = vsel %vm849, %v840, -1e+30
        %v851 = vsel %vm598, %v850, -inf
        %852 = vmax.xlane.f32.xlu0 %v851
        %v853 = vpop.xlane.xlu0 %852
        %v854 = vsub.f32 %v850, %v853
        %v855 = vmul.f32 %v854, 1.442695
        %v856 = vpow.pop %v855
        %v857 = vsel %vm598, %v856, 0.0
        %858 = vadd.xlane.f32.xlu0 %v857
        %v859 = vpop.xlane.xlu0 %858
        %v860 = vlog2.pop %v859
        %v861 = vmul.f32 %v860, 0.6931472
        %v862 = vsub.f32 %v854, %v861
        %s863 = scalar_lea.vmem %s336, 2 [#allocation8]
        %864 = vst [vmem:[%s863] sm:$0x3] %v862
        %s865 = scalar_lea.vmem %s278, 64 [#allocation2]
        %v866 = vld [vmem:[%s865] sm:$0xff]
        %v867 = vld [vmem:[%s865 + $0x8] sm:$0xff]
        %v868 = vld [vmem:[%s865 + $0x10] sm:$0xff]
        %v869 = vld [vmem:[%s865 + $0x18] sm:$0xff]
        %s870 = scalar_lea.vmem %s287, 64 [#allocation5]
        %v871 = vld [vmem:[%s870] sm:$0xff]
        %v872 = vld [vmem:[%s870 + $0x8] sm:$0xff]
        %v873 = vld [vmem:[%s870 + $0x10] sm:$0xff]
        %v874 = vld [vmem:[%s870 + $0x18] sm:$0xff]
        %s875 = scalar_lea.vmem %s296, 64 [#allocation7]
        %v876 = vld [vmem:[%s875] sm:$0xff]
        %v877 = vld [vmem:[%s875 + $0x8] sm:$0xff]
        %v878 = vld [vmem:[%s875 + $0x10] sm:$0xff]
        %v879 = vld [vmem:[%s875 + $0x18] sm:$0xff]
        %s880 = scalar_lea.vmem %s343, 2
        %v881 = vld [vmem:[%s880] sm:$0x1]
        %vm882 = vnez %v881
        %883 = vmatprep.subr.mxu0 0.0
        %884 = vmatpush1.msra.mxu0 %v871
        %885 = vmatprep.subr.mxu0 0.0
        %886 = vmatpush1.msra.mxu0 %v872
        %887 = vmatprep.subr.mxu0 0.0
        %888 = vmatpush1.msra.mxu0 %v873
        %889 = vmatprep.subr.mxu0 0.0
        %890 = vmatpush1.msra.mxu0 %v874
        %891 = vmatprep.subr.mxu0 0.0
        %892 = vmatpush1.msra.mxu0 0.0
        %893 = vmatprep.subr.mxu0 0.0
        %894 = vmatpush1.msra.mxu0 0.0
        %895 = vmatprep.subr.mxu0 0.0
        %896 = vmatpush1.msra.mxu0 0.0
        %897 = vmatprep.subr.mxu0 0.0
        %898 = vmatpush1.msra.mxu0 0.0
        %899 = vmatprep.subr.mxu0 0.0
        %900 = vmatpush1.msra.mxu0 0.0
        %901 = vmatprep.subr.mxu0 0.0
        %902 = vmatpush1.msra.mxu0 0.0
        %903 = vmatprep.subr.mxu0 0.0
        %904 = vmatpush1.msra.mxu0 0.0
        %905 = vmatprep.subr.mxu0 0.0
        %906 = vmatpush1.msra.mxu0 0.0
        %907 = vmatprep.subr.mxu0 0.0
        %908 = vmatpush1.msra.mxu0 0.0
        %909 = vmatprep.subr.mxu0 0.0
        %910 = vmatpush1.msra.mxu0 0.0
        %911 = vmatprep.subr.mxu0 0.0
        %912 = vmatpush1.msra.mxu0 0.0
        %913 = vmatprep.subr.mxu0 0.0
        %914 = vmatpush1.msra.mxu0 0.0
        %915 = vmatprep.subr.mxu0 0.0
        %916 = vmatpush1.msra.mxu0 0.0
        %917 = vmatprep.subr.mxu0 0.0
        %918 = vmatpush1.msra.mxu0 0.0
        %919 = vmatprep.subr.mxu0 0.0
        %920 = vmatpush1.msra.mxu0 0.0
        %921 = vmatprep.subr.mxu0 0.0
        %922 = vmatpush1.msra.mxu0 0.0
        %923 = vmatprep.subr.mxu0 0.0
        %924 = vmatpush1.msra.mxu0 0.0
        %925 = vmatprep.subr.mxu0 0.0
        %926 = vmatpush1.msra.mxu0 0.0
        %927 = vmatprep.subr.mxu0 0.0
        %928 = vmatpush1.msra.mxu0 0.0
        %929 = vmatprep.subr.mxu0 0.0
        %930 = vmatpush1.msra.mxu0 0.0
        %931 = vmatprep.subr.mxu0 0.0
        %932 = vmatpush1.msra.mxu0 0.0
        %933 = vmatprep.subr.mxu0 0.0
        %934 = vmatpush1.msra.mxu0 0.0
        %935 = vmatprep.subr.mxu0 0.0
        %936 = vmatpush1.msra.mxu0 0.0
        %937 = vmatprep.subr.mxu0 0.0
        %938 = vmatpush1.msra.mxu0 0.0
        %939 = vmatprep.subr.mxu0 0.0
        %940 = vmatpush1.msra.mxu0 0.0
        %941 = vmatprep.subr.mxu0 0.0
        %942 = vmatpush1.msra.mxu0 0.0
        %943 = vmatprep.subr.mxu0 0.0
        %944 = vmatpush1.msra.mxu0 0.0
        %945 = vmatprep.subr.mxu0 0.0
        %946 = vmatpush1.msra.mxu0 0.0
        %947 = vmatprep.mubr.f32.mxu0 0.0
        %948 = vmatmul.mubr.f32.gmra.mrb[0].mxu0 %v369
        %v949 = vpop.f32.mrb[0].mxu0
        %v950 = vadd.f32 0.0, %v949
        %v951 = vpop.f32.mrb[0].mxu0
        %952 = vdwg.mxu0
        %953 = vmatprep.subr.mxu0 0.0
        %954 = vmatpush1.msra.mxu0 %v866
        %955 = vmatprep.subr.mxu0 0.0
        %956 = vmatpush1.msra.mxu0 %v867
        %957 = vmatprep.subr.mxu0 0.0
        %958 = vmatpush1.msra.mxu0 %v868
        %959 = vmatprep.subr.mxu0 0.0
        %960 = vmatpush1.msra.mxu0 %v869
        %961 = vmatprep.subr.mxu0 0.0
        %962 = vmatpush1.msra.mxu0 0.0
        %963 = vmatprep.subr.mxu0 0.0
        %964 = vmatpush1.msra.mxu0 0.0
        %965 = vmatprep.subr.mxu0 0.0
        %966 = vmatpush1.msra.mxu0 0.0
        %967 = vmatprep.subr.mxu0 0.0
        %968 = vmatpush1.msra.mxu0 0.0
        %969 = vmatprep.subr.mxu0 0.0
        %970 = vmatpush1.msra.mxu0 0.0
        %971 = vmatprep.subr.mxu0 0.0
        %972 = vmatpush1.msra.mxu0 0.0
        %973 = vmatprep.subr.mxu0 0.0
        %974 = vmatpush1.msra.mxu0 0.0
        %975 = vmatprep.subr.mxu0 0.0
        %976 = vmatpush1.msra.mxu0 0.0
        %977 = vmatprep.subr.mxu0 0.0
        %978 = vmatpush1.msra.mxu0 0.0
        %979 = vmatprep.subr.mxu0 0.0
        %980 = vmatpush1.msra.mxu0 0.0
        %981 = vmatprep.subr.mxu0 0.0
        %982 = vmatpush1.msra.mxu0 0.0
        %983 = vmatprep.subr.mxu0 0.0
        %984 = vmatpush1.msra.mxu0 0.0
        %985 = vmatprep.subr.mxu0 0.0
        %986 = vmatpush1.msra.mxu0 0.0
        %987 = vmatprep.subr.mxu0 0.0
        %988 = vmatpush1.msra.mxu0 0.0
        %989 = vmatprep.subr.mxu0 0.0
        %990 = vmatpush1.msra.mxu0 0.0
        %991 = vmatprep.subr.mxu0 0.0
        %992 = vmatpush1.msra.mxu0 0.0
        %993 = vmatprep.subr.mxu0 0.0
        %994 = vmatpush1.msra.mxu0 0.0
        %995 = vmatprep.subr.mxu0 0.0
        %996 = vmatpush1.msra.mxu0 0.0
        %997 = vmatprep.subr.mxu0 0.0
        %998 = vmatpush1.msra.mxu0 0.0
        %999 = vmatprep.subr.mxu0 0.0
        %1000 = vmatpush1.msra.mxu0 0.0
        %1001 = vmatprep.subr.mxu0 0.0
        %1002 = vmatpush1.msra.mxu0 0.0
        %1003 = vmatprep.subr.mxu0 0.0
        %1004 = vmatpush1.msra.mxu0 0.0
        %1005 = vmatprep.subr.mxu0 0.0
        %1006 = vmatpush1.msra.mxu0 0.0
        %1007 = vmatprep.subr.mxu0 0.0
        %1008 = vmatpush1.msra.mxu0 0.0
        %1009 = vmatprep.subr.mxu0 0.0
        %1010 = vmatpush1.msra.mxu0 0.0
        %1011 = vmatprep.subr.mxu0 0.0
        %1012 = vmatpush1.msra.mxu0 0.0
        %1013 = vmatprep.subr.mxu0 0.0
        %1014 = vmatpush1.msra.mxu0 0.0
        %1015 = vmatprep.subr.mxu0 0.0
        %1016 = vmatpush1.msra.mxu0 0.0
        %1017 = vmatprep.mubr.f32.mxu0 0.0
        %1018 = vmatmul.mubr.f32.gmra.mrb[0].mxu0 %v442
        %v1019 = vpop.f32.mrb[0].mxu0
        %v1020 = vadd.f32 %v950, %v1019
        %v1021 = vpop.f32.mrb[0].mxu0
        %1022 = vdwg.mxu0
        %1023 = vmatprep.subr.mxu0 0.0
        %1024 = vmatpush1.msra.mxu0 %v876
        %1025 = vmatprep.subr.mxu0 0.0
        %1026 = vmatpush1.msra.mxu0 %v877
        %1027 = vmatprep.subr.mxu0 0.0
        %1028 = vmatpush1.msra.mxu0 %v878
        %1029 = vmatprep.subr.mxu0 0.0
        %1030 = vmatpush1.msra.mxu0 %v879
        %1031 = vmatprep.subr.mxu0 0.0
        %1032 = vmatpush1.msra.mxu0 0.0
        %1033 = vmatprep.subr.mxu0 0.0
        %1034 = vmatpush1.msra.mxu0 0.0
        %1035 = vmatprep.subr.mxu0 0.0
        %1036 = vmatpush1.msra.mxu0 0.0
        %1037 = vmatprep.subr.mxu0 0.0
        %1038 = vmatpush1.msra.mxu0 0.0
        %1039 = vmatprep.subr.mxu0 0.0
        %1040 = vmatpush1.msra.mxu0 0.0
        %1041 = vmatprep.subr.mxu0 0.0
        %1042 = vmatpush1.msra.mxu0 0.0
        %1043 = vmatprep.subr.mxu0 0.0
        %1044 = vmatpush1.msra.mxu0 0.0
        %1045 = vmatprep.subr.mxu0 0.0
        %1046 = vmatpush1.msra.mxu0 0.0
        %1047 = vmatprep.subr.mxu0 0.0
        %1048 = vmatpush1.msra.mxu0 0.0
        %1049 = vmatprep.subr.mxu0 0.0
        %1050 = vmatpush1.msra.mxu0 0.0
        %1051 = vmatprep.subr.mxu0 0.0
        %1052 = vmatpush1.msra.mxu0 0.0
        %1053 = vmatprep.subr.mxu0 0.0
        %1054 = vmatpush1.msra.mxu0 0.0
        %1055 = vmatprep.subr.mxu0 0.0
        %1056 = vmatpush1.msra.mxu0 0.0
        %1057 = vmatprep.subr.mxu0 0.0
        %1058 = vmatpush1.msra.mxu0 0.0
        %1059 = vmatprep.subr.mxu0 0.0
        %1060 = vmatpush1.msra.mxu0 0.0
        %1061 = vmatprep.subr.mxu0 0.0
        %1062 = vmatpush1.msra.mxu0 0.0
        %1063 = vmatprep.subr.mxu0 0.0
        %1064 = vmatpush1.msra.mxu0 0.0
        %1065 = vmatprep.subr.mxu0 0.0
        %1066 = vmatpush1.msra.mxu0 0.0
        %1067 = vmatprep.subr.mxu0 0.0
        %1068 = vmatpush1.msra.mxu0 0.0
        %1069 = vmatprep.subr.mxu0 0.0
        %1070 = vmatpush1.msra.mxu0 0.0
        %1071 = vmatprep.subr.mxu0 0.0
        %1072 = vmatpush1.msra.mxu0 0.0
        %1073 = vmatprep.subr.mxu0 0.0
        %1074 = vmatpush1.msra.mxu0 0.0
        %1075 = vmatprep.subr.mxu0 0.0
        %1076 = vmatpush1.msra.mxu0 0.0
        %1077 = vmatprep.subr.mxu0 0.0
        %1078 = vmatpush1.msra.mxu0 0.0
        %1079 = vmatprep.subr.mxu0 0.0
        %1080 = vmatpush1.msra.mxu0 0.0
        %1081 = vmatprep.subr.mxu0 0.0
        %1082 = vmatpush1.msra.mxu0 0.0
        %1083 = vmatprep.subr.mxu0 0.0
        %1084 = vmatpush1.msra.mxu0 0.0
        %1085 = vmatprep.subr.mxu0 0.0
        %1086 = vmatpush1.msra.mxu0 0.0
        %1087 = vmatprep.mubr.f32.mxu0 0.0
        %1088 = vmatmul.mubr.f32.gmra.mrb[0].mxu0 %v515
        %v1089 = vpop.f32.mrb[0].mxu0
        %v1090 = vadd.f32 0.0, %v1089
        %v1091 = vpop.f32.mrb[0].mxu0
        %1092 = vdwg.mxu0
        %v1093 = vadd.f32 %v1020, %v1090
        %v1094 = vsel %vm882, 16843009, 0
        %v1095 = vunpack.c.0.s8 %v1094
        %vm1096 = vcmp.ne.s32.totalorder %v1095, 0
        %v1097 = vsel %vm1096, 1, 0
        %v1098 = vlaneseq
        %v1099 = vshrl.u32 %v1098, 7
        %v1100 = vsub.s32 0, %v1099
        %v1101 = vrot.slane %v1097, %v1100
        %vm1102 = vcmp.eq.s32.totalorder %v1101, 1
        %v1103 = vsel %vm1102, %v1093, -1e+30
        %v1104 = vsel %vm598, %v1103, -inf
        %1105 = vmax.xlane.f32.xlu0 %v1104
        %v1106 = vpop.xlane.xlu0 %1105
        %v1107 = vsub.f32 %v1103, %v1106
        %v1108 = vmul.f32 %v1107, 1.442695
        %v1109 = vpow.pop %v1108
        %v1110 = vsel %vm598, %v1109, 0.0
        %1111 = vadd.xlane.f32.xlu0 %v1110
        %v1112 = vpop.xlane.xlu0 %1111
        %v1113 = vlog2.pop %v1112
        %v1114 = vmul.f32 %v1113, 0.6931472
        %v1115 = vsub.f32 %v1107, %v1114
        %s1116 = scalar_lea.vmem %s336, 4 [#allocation8]
        %1117 = vst [vmem:[%s1116] sm:$0x3] %v1115
        %s1118 = scalar_lea.vmem %s278, 96 [#allocation2]
        %v1119 = vld [vmem:[%s1118] sm:$0xff]
        %v1120 = vld [vmem:[%s1118 + $0x8] sm:$0xff]
        %v1121 = vld [vmem:[%s1118 + $0x10] sm:$0xff]
        %v1122 = vld [vmem:[%s1118 + $0x18] sm:$0xff]
        %s1123 = scalar_lea.vmem %s287, 96 [#allocation5]
        %v1124 = vld [vmem:[%s1123] sm:$0xff]
        %v1125 = vld [vmem:[%s1123 + $0x8] sm:$0xff]
        %v1126 = vld [vmem:[%s1123 + $0x10] sm:$0xff]
        %v1127 = vld [vmem:[%s1123 + $0x18] sm:$0xff]
        %s1128 = scalar_lea.vmem %s296, 96 [#allocation7]
        %v1129 = vld [vmem:[%s1128] sm:$0xff]
        %v1130 = vld [vmem:[%s1128 + $0x8] sm:$0xff]
        %v1131 = vld [vmem:[%s1128 + $0x10] sm:$0xff]
        %v1132 = vld [vmem:[%s1128 + $0x18] sm:$0xff]
        %s1133 = scalar_lea.vmem %s343, 3
        %v1134 = vld [vmem:[%s1133] sm:$0x1]
        %vm1135 = vnez %v1134
        %1136 = vmatprep.subr.mxu0 0.0
        %1137 = vmatpush1.msra.mxu0 %v1124
        %1138 = vmatprep.subr.mxu0 0.0
        %1139 = vmatpush1.msra.mxu0 %v1125
        %1140 = vmatprep.subr.mxu0 0.0
        %1141 = vmatpush1.msra.mxu0 %v1126
        %1142 = vmatprep.subr.mxu0 0.0
        %1143 = vmatpush1.msra.mxu0 %v1127
        %1144 = vmatprep.subr.mxu0 0.0
        %1145 = vmatpush1.msra.mxu0 0.0
        %1146 = vmatprep.subr.mxu0 0.0
        %1147 = vmatpush1.msra.mxu0 0.0
        %1148 = vmatprep.subr.mxu0 0.0
        %1149 = vmatpush1.msra.mxu0 0.0
        %1150 = vmatprep.subr.mxu0 0.0
        %1151 = vmatpush1.msra.mxu0 0.0
        %1152 = vmatprep.subr.mxu0 0.0
        %1153 = vmatpush1.msra.mxu0 0.0
        %1154 = vmatprep.subr.mxu0 0.0
        %1155 = vmatpush1.msra.mxu0 0.0
        %1156 = vmatprep.subr.mxu0 0.0
        %1157 = vmatpush1.msra.mxu0 0.0
        %1158 = vmatprep.subr.mxu0 0.0
        %1159 = vmatpush1.msra.mxu0 0.0
        %1160 = vmatprep.subr.mxu0 0.0
        %1161 = vmatpush1.msra.mxu0 0.0
        %1162 = vmatprep.subr.mxu0 0.0
        %1163 = vmatpush1.msra.mxu0 0.0
        %1164 = vmatprep.subr.mxu0 0.0
        %1165 = vmatpush1.msra.mxu0 0.0
        %1166 = vmatprep.subr.mxu0 0.0
        %1167 = vmatpush1.msra.mxu0 0.0
        %1168 = vmatprep.subr.mxu0 0.0
        %1169 = vmatpush1.msra.mxu0 0.0
        %1170 = vmatprep.subr.mxu0 0.0
        %1171 = vmatpush1.msra.mxu0 0.0
        %1172 = vmatprep.subr.mxu0 0.0
        %1173 = vmatpush1.msra.mxu0 0.0
        %1174 = vmatprep.subr.mxu0 0.0
        %1175 = vmatpush1.msra.mxu0 0.0
        %1176 = vmatprep.subr.mxu0 0.0
        %1177 = vmatpush1.msra.mxu0 0.0
        %1178 = vmatprep.subr.mxu0 0.0
        %1179 = vmatpush1.msra.mxu0 0.0
        %1180 = vmatprep.subr.mxu0 0.0
        %1181 = vmatpush1.msra.mxu0 0.0
        %1182 = vmatprep.subr.mxu0 0.0
        %1183 = vmatpush1.msra.mxu0 0.0
        %1184 = vmatprep.subr.mxu0 0.0
        %1185 = vmatpush1.msra.mxu0 0.0
        %1186 = vmatprep.subr.mxu0 0.0
        %1187 = vmatpush1.msra.mxu0 0.0
        %1188 = vmatprep.subr.mxu0 0.0
        %1189 = vmatpush1.msra.mxu0 0.0
        %1190 = vmatprep.subr.mxu0 0.0
        %1191 = vmatpush1.msra.mxu0 0.0
        %1192 = vmatprep.subr.mxu0 0.0
        %1193 = vmatpush1.msra.mxu0 0.0
        %1194 = vmatprep.subr.mxu0 0.0
        %1195 = vmatpush1.msra.mxu0 0.0
        %1196 = vmatprep.subr.mxu0 0.0
        %1197 = vmatpush1.msra.mxu0 0.0
        %1198 = vmatprep.subr.mxu0 0.0
        %1199 = vmatpush1.msra.mxu0 0.0
        %1200 = vmatprep.mubr.f32.mxu0 0.0
        %1201 = vmatmul.mubr.f32.gmra.mrb[0].mxu0 %v369
        %v1202 = vpop.f32.mrb[0].mxu0
        %v1203 = vadd.f32 0.0, %v1202
        %v1204 = vpop.f32.mrb[0].mxu0
        %1205 = vdwg.mxu0
        %1206 = vmatprep.subr.mxu0 0.0
        %1207 = vmatpush1.msra.mxu0 %v1119
        %1208 = vmatprep.subr.mxu0 0.0
        %1209 = vmatpush1.msra.mxu0 %v1120
        %1210 = vmatprep.subr.mxu0 0.0
        %1211 = vmatpush1.msra.mxu0 %v1121
        %1212 = vmatprep.subr.mxu0 0.0
        %1213 = vmatpush1.msra.mxu0 %v1122
        %1214 = vmatprep.subr.mxu0 0.0
        %1215 = vmatpush1.msra.mxu0 0.0
        %1216 = vmatprep.subr.mxu0 0.0
        %1217 = vmatpush1.msra.mxu0 0.0
        %1218 = vmatprep.subr.mxu0 0.0
        %1219 = vmatpush1.msra.mxu0 0.0
        %1220 = vmatprep.subr.mxu0 0.0
        %1221 = vmatpush1.msra.mxu0 0.0
        %1222 = vmatprep.subr.mxu0 0.0
        %1223 = vmatpush1.msra.mxu0 0.0
        %1224 = vmatprep.subr.mxu0 0.0
        %1225 = vmatpush1.msra.mxu0 0.0
        %1226 = vmatprep.subr.mxu0 0.0
        %1227 = vmatpush1.msra.mxu0 0.0
        %1228 = vmatprep.subr.mxu0 0.0
        %1229 = vmatpush1.msra.mxu0 0.0
        %1230 = vmatprep.subr.mxu0 0.0
        %1231 = vmatpush1.msra.mxu0 0.0
        %1232 = vmatprep.subr.mxu0 0.0
        %1233 = vmatpush1.msra.mxu0 0.0
        %1234 = vmatprep.subr.mxu0 0.0
        %1235 = vmatpush1.msra.mxu0 0.0
        %1236 = vmatprep.subr.mxu0 0.0
        %1237 = vmatpush1.msra.mxu0 0.0
        %1238 = vmatprep.subr.mxu0 0.0
        %1239 = vmatpush1.msra.mxu0 0.0
        %1240 = vmatprep.subr.mxu0 0.0
        %1241 = vmatpush1.msra.mxu0 0.0
        %1242 = vmatprep.subr.mxu0 0.0
        %1243 = vmatpush1.msra.mxu0 0.0
        %1244 = vmatprep.subr.mxu0 0.0
        %1245 = vmatpush1.msra.mxu0 0.0
        %1246 = vmatprep.subr.mxu0 0.0
        %1247 = vmatpush1.msra.mxu0 0.0
        %1248 = vmatprep.subr.mxu0 0.0
        %1249 = vmatpush1.msra.mxu0 0.0
        %1250 = vmatprep.subr.mxu0 0.0
        %1251 = vmatpush1.msra.mxu0 0.0
        %1252 = vmatprep.subr.mxu0 0.0
        %1253 = vmatpush1.msra.mxu0 0.0
        %1254 = vmatprep.subr.mxu0 0.0
        %1255 = vmatpush1.msra.mxu0 0.0
        %1256 = vmatprep.subr.mxu0 0.0
        %1257 = vmatpush1.msra.mxu0 0.0
        %1258 = vmatprep.subr.mxu0 0.0
        %1259 = vmatpush1.msra.mxu0 0.0
        %1260 = vmatprep.subr.mxu0 0.0
        %1261 = vmatpush1.msra.mxu0 0.0
        %1262 = vmatprep.subr.mxu0 0.0
        %1263 = vmatpush1.msra.mxu0 0.0
        %1264 = vmatprep.subr.mxu0 0.0
        %1265 = vmatpush1.msra.mxu0 0.0
        %1266 = vmatprep.subr.mxu0 0.0
        %1267 = vmatpush1.msra.mxu0 0.0
        %1268 = vmatprep.subr.mxu0 0.0
        %1269 = vmatpush1.msra.mxu0 0.0
        %1270 = vmatprep.mubr.f32.mxu0 0.0
        %1271 = vmatmul.mubr.f32.gmra.mrb[0].mxu0 %v442
        %v1272 = vpop.f32.mrb[0].mxu0
        %v1273 = vadd.f32 %v1203, %v1272
        %v1274 = vpop.f32.mrb[0].mxu0
        %1275 = vdwg.mxu0
        %1276 = vmatprep.subr.mxu0 0.0
        %1277 = vmatpush1.msra.mxu0 %v1129
        %1278 = vmatprep.subr.mxu0 0.0
        %1279 = vmatpush1.msra.mxu0 %v1130
        %1280 = vmatprep.subr.mxu0 0.0
        %1281 = vmatpush1.msra.mxu0 %v1131
        %1282 = vmatprep.subr.mxu0 0.0
        %1283 = vmatpush1.msra.mxu0 %v1132
        %1284 = vmatprep.subr.mxu0 0.0
        %1285 = vmatpush1.msra.mxu0 0.0
        %1286 = vmatprep.subr.mxu0 0.0
        %1287 = vmatpush1.msra.mxu0 0.0
        %1288 = vmatprep.subr.mxu0 0.0
        %1289 = vmatpush1.msra.mxu0 0.0
        %1290 = vmatprep.subr.mxu0 0.0
        %1291 = vmatpush1.msra.mxu0 0.0
        %1292 = vmatprep.subr.mxu0 0.0
        %1293 = vmatpush1.msra.mxu0 0.0
        %1294 = vmatprep.subr.mxu0 0.0
        %1295 = vmatpush1.msra.mxu0 0.0
        %1296 = vmatprep.subr.mxu0 0.0
        %1297 = vmatpush1.msra.mxu0 0.0
        %1298 = vmatprep.subr.mxu0 0.0
        %1299 = vmatpush1.msra.mxu0 0.0
        %1300 = vmatprep.subr.mxu0 0.0
        %1301 = vmatpush1.msra.mxu0 0.0
        %1302 = vmatprep.subr.mxu0 0.0
        %1303 = vmatpush1.msra.mxu0 0.0
        %1304 = vmatprep.subr.mxu0 0.0
        %1305 = vmatpush1.msra.mxu0 0.0
        %1306 = vmatprep.subr.mxu0 0.0
        %1307 = vmatpush1.msra.mxu0 0.0
        %1308 = vmatprep.subr.mxu0 0.0
        %1309 = vmatpush1.msra.mxu0 0.0
        %1310 = vmatprep.subr.mxu0 0.0
        %1311 = vmatpush1.msra.mxu0 0.0
        %1312 = vmatprep.subr.mxu0 0.0
        %1313 = vmatpush1.msra.mxu0 0.0
        %1314 = vmatprep.subr.mxu0 0.0
        %1315 = vmatpush1.msra.mxu0 0.0
        %1316 = vmatprep.subr.mxu0 0.0
        %1317 = vmatpush1.msra.mxu0 0.0
        %1318 = vmatprep.subr.mxu0 0.0
        %1319 = vmatpush1.msra.mxu0 0.0
        %1320 = vmatprep.subr.mxu0 0.0
        %1321 = vmatpush1.msra.mxu0 0.0
        %1322 = vmatprep.subr.mxu0 0.0
        %1323 = vmatpush1.msra.mxu0 0.0
        %1324 = vmatprep.subr.mxu0 0.0
        %1325 = vmatpush1.msra.mxu0 0.0
        %1326 = vmatprep.subr.mxu0 0.0
        %1327 = vmatpush1.msra.mxu0 0.0
        %1328 = vmatprep.subr.mxu0 0.0
        %1329 = vmatpush1.msra.mxu0 0.0
        %1330 = vmatprep.subr.mxu0 0.0
        %1331 = vmatpush1.msra.mxu0 0.0
        %1332 = vmatprep.subr.mxu0 0.0
        %1333 = vmatpush1.msra.mxu0 0.0
        %1334 = vmatprep.subr.mxu0 0.0
        %1335 = vmatpush1.msra.mxu0 0.0
        %1336 = vmatprep.subr.mxu0 0.0
        %1337 = vmatpush1.msra.mxu0 0.0
        %1338 = vmatprep.subr.mxu0 0.0
        %1339 = vmatpush1.msra.mxu0 0.0
        %1340 = vmatprep.mubr.f32.mxu0 0.0
        %1341 = vmatmul.mubr.f32.gmra.mrb[0].mxu0 %v515
        %v1342 = vpop.f32.mrb[0].mxu0
        %v1343 = vadd.f32 0.0, %v1342
        %v1344 = vpop.f32.mrb[0].mxu0
        %1345 = vdwg.mxu0
        %v1346 = vadd.f32 %v1273, %v1343
        %v1347 = vsel %vm1135, 16843009, 0
        %v1348 = vunpack.c.0.s8 %v1347
        %vm1349 = vcmp.ne.s32.totalorder %v1348, 0
        %v1350 = vsel %vm1349, 1, 0
        %v1351 = vlaneseq
        %v1352 = vshrl.u32 %v1351, 7
        %v1353 = vsub.s32 0, %v1352
        %v1354 = vrot.slane %v1350, %v1353
        %vm1355 = vcmp.eq.s32.totalorder %v1354, 1
        %v1356 = vsel %vm1355, %v1346, -1e+30
        %v1357 = vsel %vm598, %v1356, -inf
        %1358 = vmax.xlane.f32.xlu0 %v1357
        %v1359 = vpop.xlane.xlu0 %1358
        %v1360 = vsub.f32 %v1356, %v1359
        %v1361 = vmul.f32 %v1360, 1.442695
        %v1362 = vpow.pop %v1361
        %v1363 = vsel %vm598, %v1362, 0.0
        %1364 = vadd.xlane.f32.xlu0 %v1363
        %v1365 = vpop.xlane.xlu0 %1364
        %v1366 = vlog2.pop %v1365
        %v1367 = vmul.f32 %v1366, 0.6931472
        %v1368 = vsub.f32 %v1360, %v1367
        %s1369 = scalar_lea.vmem %s336, 6 [#allocation8]
        %1370 = vst [vmem:[%s1369] sm:$0x3] %v1368
        %s1371 = sand.u32 %s158, 1
        %s1372 = scalar_lea.sflag [#allocation4], %s1371
        %s1373 = sand.u32 %s158, 1
        %s1374 = smul.addr %s1373, 8
        %s1375 = scalar_lea.vmem [#allocation8], %s1374
        // Predicated region
        $region53: #{tpu_custom_call.1} parent=39 // pred_check
          %p1376 = pneg %p168
        $region54: #{tpu_custom_call.1} parent=39 // pred_check_branch
          %1378 = sbr.rel (%p1376) target = $region56
        $region55: #{tpu_custom_call.1} parent=39 // pred_region
          %s1379 = smul.u32 4, %s25
          %s1381 = ssub.s32 128, 128
          %1382 = vsyncadd %s1372, %s1381
          %s1383 = smul.addr %s1379, 32
          %s1384 = scalar_lea.hbm %s5, %s1383
          %s1385 = sshll.u32 %s1375, 4
          %s1386 = int_to_ptr.vmem [resolvable:$true] %s1385
          %1391 = dma.vmem_to_hbm [thread:$0]  %s1386, 128, %s1384, %s1372, 32, 32, 2
        $region56: #{tpu_custom_call.1} parent=39 // pred_fallthru
          _
      $region40: #{tpu_custom_call.1} parent=5 // pred_fallthru
        _
      %p1392 = scmp.le.s32.totalorder 2, %s20
      // Predicated region
      $region57: #{tpu_custom_call.1} parent=5 // pred_check
        %p1393 = pneg %p1392
      $region58: #{tpu_custom_call.1} parent=5 // pred_check_branch
        %1395 = sbr.rel (%p1393) target = $region60
      $region59: #{tpu_custom_call.1} parent=5 // pred_region
        %s1396 = ssub.s32 %s20, 2
        // Predicated region
        $region61: #{tpu_custom_call.1} parent=59 // pred_check
          %p1397 = pneg %p174
        $region62: #{tpu_custom_call.1} parent=59 // pred_check_branch
          %1399 = sbr.rel (%p1397) target = $region64
        $region63: #{tpu_custom_call.1} parent=59 // pred_region
          %s1400 = sand.u32 %s159, 1
          %s1401 = scalar_lea.sflag [#allocation4], %s1400
          %s1402 = sand.u32 %s159, 1
          %s1403 = smul.addr %s1402, 8
          %s1404 = scalar_lea.vmem [#allocation8], %s1403
          %1405 = dma.done %s1401, 128
        $region64: #{tpu_custom_call.1} parent=59 // pred_fallthru
          _
      $region60: #{tpu_custom_call.1} parent=5 // pred_fallthru
        _
    $region6: #{tpu_custom_call.1} parent=1 // loop_footer
      %s24 = sadd.s32 1, %s20
    $region7: #{tpu_custom_call.1} parent=1 // loop_footer_branch
      %19 = sbr.rel target = $region3
    $region8: #{tpu_custom_call.1} parent=1 // loop_exit
      _
    %1406 = vsyncpa [#allocation3], 1
    %s1407 = scalar_lea.sflag [#allocation3], 1
    %1408 = vsyncpa %s1407, 1
    %1409 = vsyncpa [#allocation6], 1
    %s1410 = scalar_lea.sflag [#allocation6], 1
    %1411 = vsyncpa %s1410, 1
    %1412 = vsyncpa [#allocation4], 1
    %s1413 = scalar_lea.sflag [#allocation4], 1
    %1414 = vsyncpa %s1413, 1

</llo_original>
